<compile_context>
chip_gen: v5e
topology: v5e:2x2
jax: 0.10.0
libtpu: 0.0.40
codegen_flags: <defaults>
</compile_context>

<pallas_src>
import numpy as np
import jax
import jax.numpy as jnp
from jax.experimental import pallas as pl
from jax.experimental.pallas import tpu as pltpu

_INV_SQRT2 = 0.7071067811865476

# conv1 / shortcut im2col tap order: CENTER tap first, so the shortcut input is a
# zero-offset lane slice of the patch matrix (no lane shift, no extra DMA stream).
_TAP_ORDER = ((1, 1), (0, 0), (0, 1), (0, 2), (1, 0), (1, 2), (2, 0), (2, 1), (2, 2))


def _gelu(x):
    # torch.nn.GELU() default is the exact erf form.
    return 0.5 * x * (1.0 + jax.lax.erf(x * _INV_SQRT2))


def _make_kernel(Wo, HoWo, c_in, c_out, has_proj):
    def kernel(p_ref, mask_ref, w1_ref, b1_ref, w2_ref, b2_ref, *rest):
        if has_proj:
            ws_ref, bs_ref, o_ref = rest
        else:
            (o_ref,) = rest

        patch = p_ref[0]                                            # (HoWo, 9*Cin) f32

        # ---- conv1 (single im2col matmul) + folded BN1 + GELU --------------------
        h = jnp.dot(patch, w1_ref[...], preferred_element_type=jnp.float32)
        h = _gelu(h + b1_ref[...])                                  # (HoWo, Cout) f32

        # ---- conv2: zero-padded flat-row shifts, 9 matmuls, f32 accumulate -------
        # The W-wraparound mask is per output row, so it commutes with the
        # right-matmul: mask once per dx column group (2 multiplies instead of 6).
        zpad = jnp.zeros((Wo + 1, c_out), jnp.float32)
        hp = jnp.concatenate([zpad, h, zpad], axis=0)               # (HoWo+2Wo+2, Cout)
        acc = jnp.broadcast_to(b2_ref[...], (HoWo, c_out))          # seeded with BN2 shift
        for dx in range(3):
            part = None
            for dy in range(3):
                start = (Wo + 1) + (dy - 1) * Wo + (dx - 1)         # static offset
                d = jnp.dot(hp[start:start + HoWo, :], w2_ref[dy * 3 + dx],
                            preferred_element_type=jnp.float32)
                part = d if part is None else part + d
            if dx != 1:
                part = part * mask_ref[0 if dx == 0 else 1]         # (HoWo, 1) wrap mask
            acc = acc + part

        # ---- shortcut: center im2col tap == x at strided positions ---------------
        center = patch[:, :c_in]                                    # (HoWo, Cin)
        if has_proj:
            sc = jnp.dot(center, ws_ref[...],
                         preferred_element_type=jnp.float32) + bs_ref[...]
        else:
            sc = center                                             # identity (Cin == Cout)

        o_ref[0] = _gelu(acc + sc).astype(o_ref.dtype)

    return kernel


def residual_block(x_nchw, p, *, stride=1, eps=1e-5):
    """Forward of the PyTorch ResidualBlock (eval-mode BN). x: (N, Cin, H, W) f32."""
    N, Cin, H, W = x_nchw.shape
    Cout = p["conv1_w"].shape[-1]
    has_proj = (stride != 1) or (Cin != Cout)
    Ho = (H - 1) // stride + 1
    Wo = (W - 1) // stride + 1
    HoWo = Ho * Wo

    x = jnp.transpose(x_nchw, (0, 2, 3, 1))                         # NHWC

    # im2col for conv1 (XLA slicing only): (N, HoWo, 9*Cin), K ordered (tap, ci),
    # center tap first.
    xpad = jnp.pad(x, ((0, 0), (1, 1), (1, 1), (0, 0)))
    taps = [xpad[:, dy: dy + (Ho - 1) * stride + 1: stride,
                    dx: dx + (Wo - 1) * stride + 1: stride, :]
            for dy, dx in _TAP_ORDER]
    patches = jnp.stack(taps, axis=3).reshape(N, HoWo, 9 * Cin)

    # Fold eval-mode BatchNorm + conv bias into per-out-channel weight scale / shift.
    def fold(w, gamma, beta, mean, var, conv_b):
        s = gamma / jnp.sqrt(var + eps)                             # (Cout,)
        return w * s, (beta + (conv_b - mean) * s).reshape(1, Cout)

    w1_raw = jnp.stack([p["conv1_w"][dy, dx] for dy, dx in _TAP_ORDER], axis=0)
    w1, b1 = fold(w1_raw, p["bn1_g"], p["bn1_b"], p["bn1_m"], p["bn1_v"], p["conv1_b"])
    w1 = w1.reshape(9 * Cin, Cout)                                  # (tap, ci) x co

    w2, b2 = fold(p["conv2_w"].reshape(9, Cout, Cout),
                  p["bn2_g"], p["bn2_b"], p["bn2_m"], p["bn2_v"], p["conv2_b"])

    # W-wraparound masks for the conv2 flat-row-shift taps; depend only on dx.
    xcol = np.arange(HoWo) % Wo
    masks = np.zeros((2, HoWo, 1), np.float32)
    masks[0, :, 0] = (xcol >= 1).astype(np.float32)                 # dx == 0 (left)
    masks[1, :, 0] = (xcol <= Wo - 2).astype(np.float32)            # dx == 2 (right)
    masks = jnp.asarray(masks)

    const2 = lambda i: (0, 0)       # resident weights / shifts (constant index_map)
    const3 = lambda i: (0, 0, 0)
    batch3 = lambda i: (i, 0, 0)    # one full image per grid step

    in_arrays = [patches, masks, w1, b1, w2, b2]
    in_specs = [
        pl.BlockSpec((1, HoWo, 9 * Cin), batch3),     # im2col patches
        pl.BlockSpec((2, HoWo, 1), const3),           # conv2 wraparound masks
        pl.BlockSpec((9 * Cin, Cout), const2),        # conv1 weight (BN1 folded)
        pl.BlockSpec((1, Cout), const2),              # BN1 shift
        pl.BlockSpec((9, Cout, Cout), const3),        # conv2 weight per tap (BN2 folded)
        pl.BlockSpec((1, Cout), const2),              # BN2 shift
    ]
    if has_proj:
        wsc, bsc = fold(p["sc_w"].reshape(Cin, Cout),
                        p["scbn_g"], p["scbn_b"], p["scbn_m"], p["scbn_v"], p["sc_b"])
        in_arrays += [wsc, bsc]
        in_specs += [pl.BlockSpec((Cin, Cout), const2),             # shortcut 1x1 weight
                     pl.BlockSpec((1, Cout), const2)]               # shortcut BN shift

    kernel = _make_kernel(Wo, HoWo, Cin, Cout, has_proj)
    out_flat = pl.pallas_call(
        kernel,
        out_shape=jax.ShapeDtypeStruct((N, HoWo, Cout), x.dtype),
        grid_spec=pltpu.PrefetchScalarGridSpec(
            num_scalar_prefetch=0,
            grid=(N,),
            in_specs=in_specs,
            out_specs=pl.BlockSpec((1, HoWo, Cout), batch3),
        ),
        compiler_params=pltpu.CompilerParams(
            dimension_semantics=("parallel",),          # megacore-shard over batch
        ),
    )(*in_arrays)

    out = out_flat.reshape(N, Ho, Wo, Cout)
    return jnp.transpose(out, (0, 3, 1, 2))              # back to NCHW


# ------------------------------ pure-JAX reference --------------------------------
def reference(x_nchw, p, *, stride=1, eps=1e-5):
    N, Cin, H, W = x_nchw.shape
    Cout = p["conv1_w"].shape[-1]
    has_proj = (stride != 1) or (Cin != Cout)
    x = jnp.transpose(x_nchw, (0, 2, 3, 1))
    dn = ("NHWC", "HWIO", "NHWC")

    def conv(v, w, b, s, pad):
        return jax.lax.conv_general_dilated(v, w, (s, s), pad, dimension_numbers=dn) + b

    def bn(v, g, b, m, var):
        return (v - m) * (g / jnp.sqrt(var + eps)) + b

    h = _gelu(bn(conv(x, p["conv1_w"], p["conv1_b"], stride, ((1, 1), (1, 1))),
                 p["bn1_g"], p["bn1_b"], p["bn1_m"], p["bn1_v"]))
    h = bn(conv(h, p["conv2_w"], p["conv2_b"], 1, ((1, 1), (1, 1))),
           p["bn2_g"], p["bn2_b"], p["bn2_m"], p["bn2_v"])
    if has_proj:
        sc = bn(conv(x, p["sc_w"], p["sc_b"], stride, ((0, 0), (0, 0))),
                p["scbn_g"], p["scbn_b"], p["scbn_m"], p["scbn_v"])
    else:
        sc = x
    return jnp.transpose(_gelu(h + sc), (0, 3, 1, 2))


def init_params(key, cin, cout, stride, dtype=jnp.float32):
    has_proj = (stride != 1) or (cin != cout)
    keys = jax.random.split(key, 6)

    def conv_init(k, kh, kw, ci, co):
        fan_in = ci * kh * kw
        bound = 1.0 / float(np.sqrt(fan_in))
        k1, k2 = jax.random.split(k)
        w = jax.random.uniform(k1, (kh, kw, ci, co), dtype, -bound, bound)
        b = jax.random.uniform(k2, (co,), dtype, -bound, bound)
        return w, b

    def bn_init(k, c):
        k1, k2, k3, k4 = jax.random.split(k, 4)
        g = jax.random.uniform(k1, (c,), dtype, 0.5, 1.5)
        b = jax.random.normal(k2, (c,), dtype) * 0.1
        m = jax.random.normal(k3, (c,), dtype) * 0.1
        v = jax.random.uniform(k4, (c,), dtype, 0.5, 1.5)
        return g, b, m, v

    p = {}
    p["conv1_w"], p["conv1_b"] = conv_init(keys[0], 3, 3, cin, cout)
    p["bn1_g"], p["bn1_b"], p["bn1_m"], p["bn1_v"] = bn_init(keys[1], cout)
    p["conv2_w"], p["conv2_b"] = conv_init(keys[2], 3, 3, cout, cout)
    p["bn2_g"], p["bn2_b"], p["bn2_m"], p["bn2_v"] = bn_init(keys[3], cout)
    if has_proj:
        p["sc_w"], p["sc_b"] = conv_init(keys[4], 1, 1, cin, cout)
        p["scbn_g"], p["scbn_b"], p["scbn_m"], p["scbn_v"] = bn_init(keys[5], cout)
    return p


if __name__ == "__main__":
    key = jax.random.PRNGKey(0)
    kx, kp, kx2, kp2 = jax.random.split(key, 4)

    # Config A: projection shortcut (stride=2, channel change 4 -> 8).
    N, Cin, Cout, H, W, stride = 2, 4, 8, 16, 16, 2
    x = jax.random.normal(kx, (N, Cin, H, W), jnp.float32)
    params = init_params(kp, Cin, Cout, stride)
    out = jax.block_until_ready(residual_block(x, params, stride=stride))
    ref = reference(x, params, stride=stride)
    assert out.shape == (N, Cout, H // stride, W // stride)
    assert jnp.allclose(out, ref, atol=5e-4, rtol=5e-4), "config A mismatch vs reference"

    # Config B: identity shortcut (stride=1, in_channels == out_channels).
    x2 = jax.random.normal(kx2, (2, 8, 16, 16), jnp.float32)
    params2 = init_params(kp2, 8, 8, 1)
    out2 = jax.block_until_ready(residual_block(x2, params2, stride=1))
    ref2 = reference(x2, params2, stride=1)
    assert jnp.allclose(out2, ref2, atol=5e-4, rtol=5e-4), "config B mismatch vs reference"

    print("KERNEL_OK")
</pallas_src>

<mosaic_0001>
module attributes {stable_mosaic.version = 11 : i64} {
  func.func @kernel(%arg0: i32, %arg1: memref<1x64x36xf32, #tpu.memory_space<vmem>>, %arg2: memref<2x64x1xf32, #tpu.memory_space<vmem>>, %arg3: memref<36x8xf32, #tpu.memory_space<vmem>>, %arg4: memref<1x8xf32, #tpu.memory_space<vmem>>, %arg5: memref<9x8x8xf32, #tpu.memory_space<vmem>>, %arg6: memref<1x8xf32, #tpu.memory_space<vmem>>, %arg7: memref<4x8xf32, #tpu.memory_space<vmem>>, %arg8: memref<1x8xf32, #tpu.memory_space<vmem>>, %arg9: memref<1x64x8xf32, #tpu.memory_space<vmem>>) attributes {dimension_semantics = [#tpu.dimension_semantics<parallel>], iteration_bounds = array<i64: 2>, scalar_prefetch = 0 : i64, scratch_operands = 0 : i64, tpu.core_type = #tpu.core_type<tc>, window_params = [{transform_indices = @transform_0, window_bounds = array<i64: 1, 64, 36>}, {pipeline_mode = #tpu.pipeline_mode<synchronous>, transform_indices = @transform_1, window_bounds = array<i64: 2, 64, 1>}, {pipeline_mode = #tpu.pipeline_mode<synchronous>, transform_indices = @transform_2, window_bounds = array<i64: 36, 8>}, {pipeline_mode = #tpu.pipeline_mode<synchronous>, transform_indices = @transform_3, window_bounds = array<i64: 1, 8>}, {pipeline_mode = #tpu.pipeline_mode<synchronous>, transform_indices = @transform_4, window_bounds = array<i64: 9, 8, 8>}, {pipeline_mode = #tpu.pipeline_mode<synchronous>, transform_indices = @transform_5, window_bounds = array<i64: 1, 8>}, {pipeline_mode = #tpu.pipeline_mode<synchronous>, transform_indices = @transform_6, window_bounds = array<i64: 4, 8>}, {pipeline_mode = #tpu.pipeline_mode<synchronous>, transform_indices = @transform_7, window_bounds = array<i64: 1, 8>}, {transform_indices = @transform_8, window_bounds = array<i64: 1, 64, 8>}]} {
    %c0 = arith.constant 0 : index
    %c0_0 = arith.constant 0 : index
    %c0_1 = arith.constant 0 : index
    %0 = vector.load %arg1[%c0, %c0_0, %c0_1] : memref<1x64x36xf32, #tpu.memory_space<vmem>>, vector<1x64x36xf32>
    %1 = vector.shape_cast %0 : vector<1x64x36xf32> to vector<64x36xf32>
    %c0_2 = arith.constant 0 : index
    %c0_3 = arith.constant 0 : index
    %2 = vector.load %arg3[%c0_2, %c0_3] : memref<36x8xf32, #tpu.memory_space<vmem>>, vector<36x8xf32>
    %cst = arith.constant dense<0.000000e+00> : vector<64x8xf32>
    %3 = tpu.matmul %1, %2, %cst {dimension_numbers = #tpu.dot_dimension_numbers<[1], [0], [0], [1], [0, 0, 1, 1], [], []>} : vector<64x36xf32>, vector<36x8xf32>, vector<64x8xf32> -> vector<64x8xf32>
    %c0_4 = arith.constant 0 : index
    %c0_5 = arith.constant 0 : index
    %4 = vector.load %arg4[%c0_4, %c0_5] : memref<1x8xf32, #tpu.memory_space<vmem>>, vector<1x8xf32>
    %5 = vector.broadcast %4 : vector<1x8xf32> to vector<64x8xf32>
    %6 = arith.addf %3, %5 : vector<64x8xf32>
    %cst_6 = arith.constant 5.000000e-01 : f32
    %7 = vector.broadcast %cst_6 : f32 to vector<64x8xf32>
    %8 = arith.mulf %7, %6 : vector<64x8xf32>
    %cst_7 = arith.constant 0.707106769 : f32
    %9 = vector.broadcast %cst_7 : f32 to vector<64x8xf32>
    %10 = arith.mulf %6, %9 : vector<64x8xf32>
    %11 = math.erf %10 : vector<64x8xf32>
    %cst_8 = arith.constant 1.000000e+00 : f32
    %12 = vector.broadcast %cst_8 : f32 to vector<64x8xf32>
    %13 = arith.addf %12, %11 : vector<64x8xf32>
    %14 = arith.mulf %8, %13 : vector<64x8xf32>
    %cst_9 = arith.constant 0.000000e+00 : f32
    %15 = vector.broadcast %cst_9 : f32 to vector<9x8xf32>
    %16 = tpu.concatenate %15, %14, %15 in 0 : vector<9x8xf32>, vector<64x8xf32>, vector<9x8xf32> -> vector<82x8xf32>
    %c0_10 = arith.constant 0 : index
    %c0_11 = arith.constant 0 : index
    %17 = vector.load %arg6[%c0_10, %c0_11] : memref<1x8xf32, #tpu.memory_space<vmem>>, vector<1x8xf32>
    %18 = vector.shape_cast %17 : vector<1x8xf32> to vector<1x8xf32>
    %19 = vector.broadcast %18 : vector<1x8xf32> to vector<64x8xf32>
    %20 = vector.extract_strided_slice %16 {offsets = [0, 0], sizes = [64, 8], strides = [1, 1]} : vector<82x8xf32> to vector<64x8xf32>
    %c0_12 = arith.constant 0 : index
    %c0_13 = arith.constant 0 : index
    %c0_14 = arith.constant 0 : index
    %21 = vector.load %arg5[%c0_12, %c0_13, %c0_14] : memref<9x8x8xf32, #tpu.memory_space<vmem>>, vector<1x8x8xf32>
    %22 = vector.shape_cast %21 : vector<1x8x8xf32> to vector<8x8xf32>
    %cst_15 = arith.constant dense<0.000000e+00> : vector<64x8xf32>
    %23 = tpu.matmul %20, %22, %cst_15 {dimension_numbers = #tpu.dot_dimension_numbers<[1], [0], [0], [1], [0, 0, 1, 1], [], []>} : vector<64x8xf32>, vector<8x8xf32>, vector<64x8xf32> -> vector<64x8xf32>
    %24 = vector.extract_strided_slice %16 {offsets = [8, 0], sizes = [64, 8], strides = [1, 1]} : vector<82x8xf32> to vector<64x8xf32>
    %c3 = arith.constant 3 : index
    %c0_16 = arith.constant 0 : index
    %c0_17 = arith.constant 0 : index
    %25 = vector.load %arg5[%c3, %c0_16, %c0_17] : memref<9x8x8xf32, #tpu.memory_space<vmem>>, vector<1x8x8xf32>
    %26 = vector.shape_cast %25 : vector<1x8x8xf32> to vector<8x8xf32>
    %cst_18 = arith.constant dense<0.000000e+00> : vector<64x8xf32>
    %27 = tpu.matmul %24, %26, %cst_18 {dimension_numbers = #tpu.dot_dimension_numbers<[1], [0], [0], [1], [0, 0, 1, 1], [], []>} : vector<64x8xf32>, vector<8x8xf32>, vector<64x8xf32> -> vector<64x8xf32>
    %28 = arith.addf %23, %27 : vector<64x8xf32>
    %29 = vector.extract_strided_slice %16 {offsets = [16, 0], sizes = [64, 8], strides = [1, 1]} : vector<82x8xf32> to vector<64x8xf32>
    %c6 = arith.constant 6 : index
    %c0_19 = arith.constant 0 : index
    %c0_20 = arith.constant 0 : index
    %30 = vector.load %arg5[%c6, %c0_19, %c0_20] : memref<9x8x8xf32, #tpu.memory_space<vmem>>, vector<1x8x8xf32>
    %31 = vector.shape_cast %30 : vector<1x8x8xf32> to vector<8x8xf32>
    %cst_21 = arith.constant dense<0.000000e+00> : vector<64x8xf32>
    %32 = tpu.matmul %29, %31, %cst_21 {dimension_numbers = #tpu.dot_dimension_numbers<[1], [0], [0], [1], [0, 0, 1, 1], [], []>} : vector<64x8xf32>, vector<8x8xf32>, vector<64x8xf32> -> vector<64x8xf32>
    %33 = arith.addf %28, %32 : vector<64x8xf32>
    %c0_22 = arith.constant 0 : index
    %c0_23 = arith.constant 0 : index
    %c0_24 = arith.constant 0 : index
    %34 = vector.load %arg2[%c0_22, %c0_23, %c0_24] : memref<2x64x1xf32, #tpu.memory_space<vmem>>, vector<1x64x1xf32>
    %35 = vector.shape_cast %34 : vector<1x64x1xf32> to vector<64x1xf32>
    %36 = vector.broadcast %35 : vector<64x1xf32> to vector<64x8xf32>
    %37 = arith.mulf %33, %36 : vector<64x8xf32>
    %38 = arith.addf %19, %37 : vector<64x8xf32>
    %39 = vector.extract_strided_slice %16 {offsets = [1, 0], sizes = [64, 8], strides = [1, 1]} : vector<82x8xf32> to vector<64x8xf32>
    %c1 = arith.constant 1 : index
    %c0_25 = arith.constant 0 : index
    %c0_26 = arith.constant 0 : index
    %40 = vector.load %arg5[%c1, %c0_25, %c0_26] : memref<9x8x8xf32, #tpu.memory_space<vmem>>, vector<1x8x8xf32>
    %41 = vector.shape_cast %40 : vector<1x8x8xf32> to vector<8x8xf32>
    %cst_27 = arith.constant dense<0.000000e+00> : vector<64x8xf32>
    %42 = tpu.matmul %39, %41, %cst_27 {dimension_numbers = #tpu.dot_dimension_numbers<[1], [0], [0], [1], [0, 0, 1, 1], [], []>} : vector<64x8xf32>, vector<8x8xf32>, vector<64x8xf32> -> vector<64x8xf32>
    %43 = vector.extract_strided_slice %16 {offsets = [9, 0], sizes = [64, 8], strides = [1, 1]} : vector<82x8xf32> to vector<64x8xf32>
    %c4 = arith.constant 4 : index
    %c0_28 = arith.constant 0 : index
    %c0_29 = arith.constant 0 : index
    %44 = vector.load %arg5[%c4, %c0_28, %c0_29] : memref<9x8x8xf32, #tpu.memory_space<vmem>>, vector<1x8x8xf32>
    %45 = vector.shape_cast %44 : vector<1x8x8xf32> to vector<8x8xf32>
    %cst_30 = arith.constant dense<0.000000e+00> : vector<64x8xf32>
    %46 = tpu.matmul %43, %45, %cst_30 {dimension_numbers = #tpu.dot_dimension_numbers<[1], [0], [0], [1], [0, 0, 1, 1], [], []>} : vector<64x8xf32>, vector<8x8xf32>, vector<64x8xf32> -> vector<64x8xf32>
    %47 = arith.addf %42, %46 : vector<64x8xf32>
    %48 = vector.extract_strided_slice %16 {offsets = [17, 0], sizes = [64, 8], strides = [1, 1]} : vector<82x8xf32> to vector<64x8xf32>
    %c7 = arith.constant 7 : index
    %c0_31 = arith.constant 0 : index
    %c0_32 = arith.constant 0 : index
    %49 = vector.load %arg5[%c7, %c0_31, %c0_32] : memref<9x8x8xf32, #tpu.memory_space<vmem>>, vector<1x8x8xf32>
    %50 = vector.shape_cast %49 : vector<1x8x8xf32> to vector<8x8xf32>
    %cst_33 = arith.constant dense<0.000000e+00> : vector<64x8xf32>
    %51 = tpu.matmul %48, %50, %cst_33 {dimension_numbers = #tpu.dot_dimension_numbers<[1], [0], [0], [1], [0, 0, 1, 1], [], []>} : vector<64x8xf32>, vector<8x8xf32>, vector<64x8xf32> -> vector<64x8xf32>
    %52 = arith.addf %47, %51 : vector<64x8xf32>
    %53 = arith.addf %38, %52 : vector<64x8xf32>
    %54 = vector.extract_strided_slice %16 {offsets = [2, 0], sizes = [64, 8], strides = [1, 1]} : vector<82x8xf32> to vector<64x8xf32>
    %c2 = arith.constant 2 : index
    %c0_34 = arith.constant 0 : index
    %c0_35 = arith.constant 0 : index
    %55 = vector.load %arg5[%c2, %c0_34, %c0_35] : memref<9x8x8xf32, #tpu.memory_space<vmem>>, vector<1x8x8xf32>
    %56 = vector.shape_cast %55 : vector<1x8x8xf32> to vector<8x8xf32>
    %cst_36 = arith.constant dense<0.000000e+00> : vector<64x8xf32>
    %57 = tpu.matmul %54, %56, %cst_36 {dimension_numbers = #tpu.dot_dimension_numbers<[1], [0], [0], [1], [0, 0, 1, 1], [], []>} : vector<64x8xf32>, vector<8x8xf32>, vector<64x8xf32> -> vector<64x8xf32>
    %58 = vector.extract_strided_slice %16 {offsets = [10, 0], sizes = [64, 8], strides = [1, 1]} : vector<82x8xf32> to vector<64x8xf32>
    %c5 = arith.constant 5 : index
    %c0_37 = arith.constant 0 : index
    %c0_38 = arith.constant 0 : index
    %59 = vector.load %arg5[%c5, %c0_37, %c0_38] : memref<9x8x8xf32, #tpu.memory_space<vmem>>, vector<1x8x8xf32>
    %60 = vector.shape_cast %59 : vector<1x8x8xf32> to vector<8x8xf32>
    %cst_39 = arith.constant dense<0.000000e+00> : vector<64x8xf32>
    %61 = tpu.matmul %58, %60, %cst_39 {dimension_numbers = #tpu.dot_dimension_numbers<[1], [0], [0], [1], [0, 0, 1, 1], [], []>} : vector<64x8xf32>, vector<8x8xf32>, vector<64x8xf32> -> vector<64x8xf32>
    %62 = arith.addf %57, %61 : vector<64x8xf32>
    %63 = vector.extract_strided_slice %16 {offsets = [18, 0], sizes = [64, 8], strides = [1, 1]} : vector<82x8xf32> to vector<64x8xf32>
    %c8 = arith.constant 8 : index
    %c0_40 = arith.constant 0 : index
    %c0_41 = arith.constant 0 : index
    %64 = vector.load %arg5[%c8, %c0_40, %c0_41] : memref<9x8x8xf32, #tpu.memory_space<vmem>>, vector<1x8x8xf32>
    %65 = vector.shape_cast %64 : vector<1x8x8xf32> to vector<8x8xf32>
    %cst_42 = arith.constant dense<0.000000e+00> : vector<64x8xf32>
    %66 = tpu.matmul %63, %65, %cst_42 {dimension_numbers = #tpu.dot_dimension_numbers<[1], [0], [0], [1], [0, 0, 1, 1], [], []>} : vector<64x8xf32>, vector<8x8xf32>, vector<64x8xf32> -> vector<64x8xf32>
    %67 = arith.addf %62, %66 : vector<64x8xf32>
    %c1_43 = arith.constant 1 : index
    %c0_44 = arith.constant 0 : index
    %c0_45 = arith.constant 0 : index
    %68 = vector.load %arg2[%c1_43, %c0_44, %c0_45] : memref<2x64x1xf32, #tpu.memory_space<vmem>>, vector<1x64x1xf32>
    %69 = vector.shape_cast %68 : vector<1x64x1xf32> to vector<64x1xf32>
    %70 = vector.broadcast %69 : vector<64x1xf32> to vector<64x8xf32>
    %71 = arith.mulf %67, %70 : vector<64x8xf32>
    %72 = arith.addf %53, %71 : vector<64x8xf32>
    %73 = vector.extract_strided_slice %1 {offsets = [0, 0], sizes = [64, 4], strides = [1, 1]} : vector<64x36xf32> to vector<64x4xf32>
    %c0_46 = arith.constant 0 : index
    %c0_47 = arith.constant 0 : index
    %74 = vector.load %arg7[%c0_46, %c0_47] : memref<4x8xf32, #tpu.memory_space<vmem>>, vector<4x8xf32>
    %cst_48 = arith.constant dense<0.000000e+00> : vector<64x8xf32>
    %75 = tpu.matmul %73, %74, %cst_48 {dimension_numbers = #tpu.dot_dimension_numbers<[1], [0], [0], [1], [0, 0, 1, 1], [], []>} : vector<64x4xf32>, vector<4x8xf32>, vector<64x8xf32> -> vector<64x8xf32>
    %c0_49 = arith.constant 0 : index
    %c0_50 = arith.constant 0 : index
    %76 = vector.load %arg8[%c0_49, %c0_50] : memref<1x8xf32, #tpu.memory_space<vmem>>, vector<1x8xf32>
    %77 = vector.broadcast %76 : vector<1x8xf32> to vector<64x8xf32>
    %78 = arith.addf %75, %77 : vector<64x8xf32>
    %79 = arith.addf %72, %78 : vector<64x8xf32>
    %cst_51 = arith.constant 5.000000e-01 : f32
    %80 = vector.broadcast %cst_51 : f32 to vector<64x8xf32>
    %81 = arith.mulf %80, %79 : vector<64x8xf32>
    %cst_52 = arith.constant 0.707106769 : f32
    %82 = vector.broadcast %cst_52 : f32 to vector<64x8xf32>
    %83 = arith.mulf %79, %82 : vector<64x8xf32>
    %84 = math.erf %83 : vector<64x8xf32>
    %cst_53 = arith.constant 1.000000e+00 : f32
    %85 = vector.broadcast %cst_53 : f32 to vector<64x8xf32>
    %86 = arith.addf %85, %84 : vector<64x8xf32>
    %87 = arith.mulf %81, %86 : vector<64x8xf32>
    %c0_54 = arith.constant 0 : index
    %c0_55 = arith.constant 0 : index
    %c0_56 = arith.constant 0 : index
    %88 = vector.load %arg9[%c0_54, %c0_55, %c0_56] : memref<1x64x8xf32, #tpu.memory_space<vmem>>, vector<1x64x8xf32>
    %89 = vector.shape_cast %88 : vector<1x64x8xf32> to vector<64x8xf32>
    %90 = vector.shape_cast %87 : vector<64x8xf32> to vector<1x64x8xf32>
    tpu.vector_store %arg9[%c0_54, %c0_55, %c0_56], %90 {strides = array<i32>} : memref<1x64x8xf32, #tpu.memory_space<vmem>>, vector<1x64x8xf32>,
    return
  }
  func.func @transform_0(%arg0: i32) -> (i32, i32, i32) {
    %c0_i32 = arith.constant 0 : i32
    %c0_i32_0 = arith.constant 0 : i32
    %c0_i32_1 = arith.constant 0 : i32
    return %arg0, %c0_i32, %c0_i32_0 : i32, i32, i32
  }
  func.func @transform_1(%arg0: i32) -> (i32, i32, i32) {
    %c0_i32 = arith.constant 0 : i32
    %c0_i32_0 = arith.constant 0 : i32
    %c0_i32_1 = arith.constant 0 : i32
    %c0_i32_2 = arith.constant 0 : i32
    return %c0_i32, %c0_i32_0, %c0_i32_1 : i32, i32, i32
  }
  func.func @transform_2(%arg0: i32) -> (i32, i32) {
    %c0_i32 = arith.constant 0 : i32
    %c0_i32_0 = arith.constant 0 : i32
    %c0_i32_1 = arith.constant 0 : i32
    return %c0_i32, %c0_i32_0 : i32, i32
  }
  func.func @transform_3(%arg0: i32) -> (i32, i32) {
    %c0_i32 = arith.constant 0 : i32
    %c0_i32_0 = arith.constant 0 : i32
    %c0_i32_1 = arith.constant 0 : i32
    return %c0_i32, %c0_i32_0 : i32, i32
  }
  func.func @transform_4(%arg0: i32) -> (i32, i32, i32) {
    %c0_i32 = arith.constant 0 : i32
    %c0_i32_0 = arith.constant 0 : i32
    %c0_i32_1 = arith.constant 0 : i32
    %c0_i32_2 = arith.constant 0 : i32
    return %c0_i32, %c0_i32_0, %c0_i32_1 : i32, i32, i32
  }
  func.func @transform_5(%arg0: i32) -> (i32, i32) {
    %c0_i32 = arith.constant 0 : i32
    %c0_i32_0 = arith.constant 0 : i32
    %c0_i32_1 = arith.constant 0 : i32
    return %c0_i32, %c0_i32_0 : i32, i32
  }
  func.func @transform_6(%arg0: i32) -> (i32, i32) {
    %c0_i32 = arith.constant 0 : i32
    %c0_i32_0 = arith.constant 0 : i32
    %c0_i32_1 = arith.constant 0 : i32
    return %c0_i32, %c0_i32_0 : i32, i32
  }
  func.func @transform_7(%arg0: i32) -> (i32, i32) {
    %c0_i32 = arith.constant 0 : i32
    %c0_i32_0 = arith.constant 0 : i32
    %c0_i32_1 = arith.constant 0 : i32
    return %c0_i32, %c0_i32_0 : i32, i32
  }
  func.func @transform_8(%arg0: i32) -> (i32, i32, i32) {
    %c0_i32 = arith.constant 0 : i32
    %c0_i32_0 = arith.constant 0 : i32
    %c0_i32_1 = arith.constant 0 : i32
    return %arg0, %c0_i32, %c0_i32_0 : i32, i32, i32
  }
}

</mosaic_0001>

<llo_original>
// kernel: tpu_custom_call.1
$region0: #{tpu_custom_call.1}
  #allocation0 [shape = 'u32[]', space=smem, size = 0x4, offset = 0x4, fixed_abs, tag = 'smem constant byte address 0x4 - core index']
  #allocation1 [shape = 'u32[72,128]{1,0:T(1,128)}', space=vmem, size = 0x9000, scoped, tag = 'internal scratch']
  %s0 = inlined_call_operand.vmem [shape: f32[2,64,36], index: 0, kind: input, shape index: {}]
  %s1 = inlined_call_operand.vmem [shape: f32[2,64,1], index: 1, kind: input, shape index: {}]
  %s2 = inlined_call_operand.vmem [shape: f32[36,8], index: 2, kind: input, shape index: {}]
  %s3 = inlined_call_operand.vmem [shape: f32[1,8], index: 3, kind: input, shape index: {}]
  %s4 = inlined_call_operand.vmem [shape: f32[9,8,8], index: 4, kind: input, shape index: {}]
  %s5 = inlined_call_operand.vmem [shape: f32[1,8], index: 5, kind: input, shape index: {}]
  %s6 = inlined_call_operand.vmem [shape: f32[4,8], index: 6, kind: input, shape index: {}]
  %s7 = inlined_call_operand.vmem [shape: f32[1,8], index: 7, kind: input, shape index: {}]
  %s8 = inlined_call_operand.vmem [shape: f32[2,64,8], index: 8, kind: output, shape index: {}]
  %s9 = sld [smem:[#allocation0]]
  $region65: #{tpu_custom_call.1} parent=0
    _
  %s11 = ssub.s32 1, %s9
  %s12 = scalar_select 0, %s11, %s9
  loop: start=0, step=1, limit=4
  $region2: #{tpu_custom_call.1} parent=0 // loop_pre_header
    _
  $region3: #{tpu_custom_call.1} parent=0 // loop_header
    %s14 = sphi 0, %s18
    %p15 = scmp.ge.s32.totalorder %s14, 4
    %s24 = sphi 0, %s26
    %s27 = sphi 0, %s24
    %s28 = sphi 0, %s27
    %s44 = sphi 0, %s28
    %s48 = sphi 0, %s48
    %s50 = sphi 0, %s48
    %s51 = sphi 0, %s50
    %s65 = sphi 0, %s51
    %s69 = sphi 0, %s69
    %s71 = sphi 0, %s69
    %s72 = sphi 0, %s71
    %s86 = sphi 0, %s72
    %s90 = sphi 0, %s90
    %s92 = sphi 0, %s90
    %s93 = sphi 0, %s92
    %s107 = sphi 0, %s93
    %s111 = sphi 0, %s111
    %s113 = sphi 0, %s111
    %s114 = sphi 0, %s113
    %s128 = sphi 0, %s114
    %s132 = sphi 0, %s132
    %s134 = sphi 0, %s132
    %s135 = sphi 0, %s134
    %s149 = sphi 0, %s135
    %s153 = sphi 0, %s153
    %s155 = sphi 0, %s153
    %s156 = sphi 0, %s155
    %s170 = sphi 0, %s156
    %s174 = sphi 0, %s174
    %s176 = sphi 0, %s174
    %s177 = sphi 0, %s176
    %s191 = sphi 0, %s177
    %s197 = sphi 0, %s199
    %s200 = sphi 0, %s197
    %s201 = sphi 0, %s200
    %s217 = sphi 0, %s201
  $region4: #{tpu_custom_call.1} parent=0 // loop_header_branch
    %17 = sbr.rel (%p15) target = $region8
  $region5: #{tpu_custom_call.1} parent=0 // loop_body
    %s19 = ssub.s32 %s14, 1
    %s20 = ssub.s32 %s14, 2
    %s21 = sadd.s32 %s14, 1
    %s22 = ssub.s32 %s14, %s21
    %p23 = scmp.eq.s32.totalorder %s22, 0
    %s25 = sadd.s32 %s24, 1
    %s26 = scalar_select %p23, %s24, %s25
    %p29 = pneg %p23
    %p30 = scmp.eq.s32.totalorder %s14, 1
    %p31 = por %p29, %p30
    %p32 = scmp.ne.s32.totalorder %s24, %s27
    %p33 = scmp.eq.s32.totalorder %s14, 0
    %p34 = por %p32, %p33
    %p35 = scmp.ne.s32.totalorder %s24, %s27
    %p36 = scmp.eq.s32.totalorder %s19, 1
    %p37 = por %p35, %p36
    %p38 = scmp.ne.s32.totalorder %s27, %s28
    %p39 = scmp.eq.s32.totalorder %s19, 0
    %p40 = por %p38, %p39
    %p41 = scmp.ne.s32.totalorder %s27, %s28
    %p42 = scmp.eq.s32.totalorder %s20, 1
    %p43 = por %p41, %p42
    %p45 = scmp.ne.s32.totalorder %s28, %s44
    %p46 = scmp.eq.s32.totalorder %s20, 0
    %p47 = por %p45, %p46
    %s49 = sadd.s32 %s48, 1
    %p52 = scmp.eq.s32.totalorder %s14, 1
    %p53 = scmp.ne.s32.totalorder %s48, %s50
    %p54 = scmp.eq.s32.totalorder %s14, 0
    %p55 = por %p53, %p54
    %p56 = scmp.ne.s32.totalorder %s48, %s50
    %p57 = scmp.eq.s32.totalorder %s19, 1
    %p58 = por %p56, %p57
    %p59 = scmp.ne.s32.totalorder %s50, %s51
    %p60 = scmp.eq.s32.totalorder %s19, 0
    %p61 = por %p59, %p60
    %p62 = scmp.ne.s32.totalorder %s50, %s51
    %p63 = scmp.eq.s32.totalorder %s20, 1
    %p64 = por %p62, %p63
    %p66 = scmp.ne.s32.totalorder %s51, %s65
    %p67 = scmp.eq.s32.totalorder %s20, 0
    %p68 = por %p66, %p67
    %s70 = sadd.s32 %s69, 1
    %p73 = scmp.eq.s32.totalorder %s14, 1
    %p74 = scmp.ne.s32.totalorder %s69, %s71
    %p75 = scmp.eq.s32.totalorder %s14, 0
    %p76 = por %p74, %p75
    %p77 = scmp.ne.s32.totalorder %s69, %s71
    %p78 = scmp.eq.s32.totalorder %s19, 1
    %p79 = por %p77, %p78
    %p80 = scmp.ne.s32.totalorder %s71, %s72
    %p81 = scmp.eq.s32.totalorder %s19, 0
    %p82 = por %p80, %p81
    %p83 = scmp.ne.s32.totalorder %s71, %s72
    %p84 = scmp.eq.s32.totalorder %s20, 1
    %p85 = por %p83, %p84
    %p87 = scmp.ne.s32.totalorder %s72, %s86
    %p88 = scmp.eq.s32.totalorder %s20, 0
    %p89 = por %p87, %p88
    %s91 = sadd.s32 %s90, 1
    %p94 = scmp.eq.s32.totalorder %s14, 1
    %p95 = scmp.ne.s32.totalorder %s90, %s92
    %p96 = scmp.eq.s32.totalorder %s14, 0
    %p97 = por %p95, %p96
    %p98 = scmp.ne.s32.totalorder %s90, %s92
    %p99 = scmp.eq.s32.totalorder %s19, 1
    %p100 = por %p98, %p99
    %p101 = scmp.ne.s32.totalorder %s92, %s93
    %p102 = scmp.eq.s32.totalorder %s19, 0
    %p103 = por %p101, %p102
    %p104 = scmp.ne.s32.totalorder %s92, %s93
    %p105 = scmp.eq.s32.totalorder %s20, 1
    %p106 = por %p104, %p105
    %p108 = scmp.ne.s32.totalorder %s93, %s107
    %p109 = scmp.eq.s32.totalorder %s20, 0
    %p110 = por %p108, %p109
    %s112 = sadd.s32 %s111, 1
    %p115 = scmp.eq.s32.totalorder %s14, 1
    %p116 = scmp.ne.s32.totalorder %s111, %s113
    %p117 = scmp.eq.s32.totalorder %s14, 0
    %p118 = por %p116, %p117
    %p119 = scmp.ne.s32.totalorder %s111, %s113
    %p120 = scmp.eq.s32.totalorder %s19, 1
    %p121 = por %p119, %p120
    %p122 = scmp.ne.s32.totalorder %s113, %s114
    %p123 = scmp.eq.s32.totalorder %s19, 0
    %p124 = por %p122, %p123
    %p125 = scmp.ne.s32.totalorder %s113, %s114
    %p126 = scmp.eq.s32.totalorder %s20, 1
    %p127 = por %p125, %p126
    %p129 = scmp.ne.s32.totalorder %s114, %s128
    %p130 = scmp.eq.s32.totalorder %s20, 0
    %p131 = por %p129, %p130
    %s133 = sadd.s32 %s132, 1
    %p136 = scmp.eq.s32.totalorder %s14, 1
    %p137 = scmp.ne.s32.totalorder %s132, %s134
    %p138 = scmp.eq.s32.totalorder %s14, 0
    %p139 = por %p137, %p138
    %p140 = scmp.ne.s32.totalorder %s132, %s134
    %p141 = scmp.eq.s32.totalorder %s19, 1
    %p142 = por %p140, %p141
    %p143 = scmp.ne.s32.totalorder %s134, %s135
    %p144 = scmp.eq.s32.totalorder %s19, 0
    %p145 = por %p143, %p144
    %p146 = scmp.ne.s32.totalorder %s134, %s135
    %p147 = scmp.eq.s32.totalorder %s20, 1
    %p148 = por %p146, %p147
    %p150 = scmp.ne.s32.totalorder %s135, %s149
    %p151 = scmp.eq.s32.totalorder %s20, 0
    %p152 = por %p150, %p151
    %s154 = sadd.s32 %s153, 1
    %p157 = scmp.eq.s32.totalorder %s14, 1
    %p158 = scmp.ne.s32.totalorder %s153, %s155
    %p159 = scmp.eq.s32.totalorder %s14, 0
    %p160 = por %p158, %p159
    %p161 = scmp.ne.s32.totalorder %s153, %s155
    %p162 = scmp.eq.s32.totalorder %s19, 1
    %p163 = por %p161, %p162
    %p164 = scmp.ne.s32.totalorder %s155, %s156
    %p165 = scmp.eq.s32.totalorder %s19, 0
    %p166 = por %p164, %p165
    %p167 = scmp.ne.s32.totalorder %s155, %s156
    %p168 = scmp.eq.s32.totalorder %s20, 1
    %p169 = por %p167, %p168
    %p171 = scmp.ne.s32.totalorder %s156, %s170
    %p172 = scmp.eq.s32.totalorder %s20, 0
    %p173 = por %p171, %p172
    %s175 = sadd.s32 %s174, 1
    %p178 = scmp.eq.s32.totalorder %s14, 1
    %p179 = scmp.ne.s32.totalorder %s174, %s176
    %p180 = scmp.eq.s32.totalorder %s14, 0
    %p181 = por %p179, %p180
    %p182 = scmp.ne.s32.totalorder %s174, %s176
    %p183 = scmp.eq.s32.totalorder %s19, 1
    %p184 = por %p182, %p183
    %p185 = scmp.ne.s32.totalorder %s176, %s177
    %p186 = scmp.eq.s32.totalorder %s19, 0
    %p187 = por %p185, %p186
    %p188 = scmp.ne.s32.totalorder %s176, %s177
    %p189 = scmp.eq.s32.totalorder %s20, 1
    %p190 = por %p188, %p189
    %p192 = scmp.ne.s32.totalorder %s177, %s191
    %p193 = scmp.eq.s32.totalorder %s20, 0
    %p194 = por %p192, %p193
    %s195 = ssub.s32 %s14, %s21
    %p196 = scmp.eq.s32.totalorder %s195, 0
    %s198 = sadd.s32 %s197, 1
    %s199 = scalar_select %p196, %s197, %s198
    %p202 = pneg %p196
    %p203 = scmp.eq.s32.totalorder %s14, 1
    %p204 = por %p202, %p203
    %p205 = scmp.ne.s32.totalorder %s197, %s200
    %p206 = scmp.eq.s32.totalorder %s14, 0
    %p207 = por %p205, %p206
    %p208 = scmp.ne.s32.totalorder %s197, %s200
    %p209 = scmp.eq.s32.totalorder %s19, 1
    %p210 = por %p208, %p209
    %p211 = scmp.ne.s32.totalorder %s200, %s201
    %p212 = scmp.eq.s32.totalorder %s19, 0
    %p213 = por %p211, %p212
    %p214 = scmp.ne.s32.totalorder %s200, %s201
    %p215 = scmp.eq.s32.totalorder %s20, 1
    %p216 = por %p214, %p215
    %p218 = scmp.ne.s32.totalorder %s201, %s217
    %p219 = scmp.eq.s32.totalorder %s20, 0
    %p220 = por %p218, %p219
    %p221 = scmp.le.s32.totalorder 1, %s14
    %p222 = scmp.lt.s32.totalorder %s14, 3
    %p223 = pnand %p221, %p222
    %p224 = pneg %p223
    // Predicated region
    $region9: #{tpu_custom_call.1} parent=5 // pred_check
      _
    $region10: #{tpu_custom_call.1} parent=5 // pred_check_branch
      %226 = sbr.rel (%p223) target = $region12
    $region11: #{tpu_custom_call.1} parent=5 // pred_region
      %s227 = ssub.s32 %s14, 1
      // Predicated region
      $region13: #{tpu_custom_call.1} parent=11 // pred_check
        %p228 = pneg %p61
      $region14: #{tpu_custom_call.1} parent=11 // pred_check_branch
        %230 = sbr.rel (%p228) target = $region16
      $region15: #{tpu_custom_call.1} parent=11 // pred_region
        _
      $region16: #{tpu_custom_call.1} parent=11 // pred_fallthru
        _
      // Predicated region
      $region17: #{tpu_custom_call.1} parent=11 // pred_check
        %p231 = pneg %p82
      $region18: #{tpu_custom_call.1} parent=11 // pred_check_branch
        %233 = sbr.rel (%p231) target = $region20
      $region19: #{tpu_custom_call.1} parent=11 // pred_region
        _
      $region20: #{tpu_custom_call.1} parent=11 // pred_fallthru
        _
      // Predicated region
      $region21: #{tpu_custom_call.1} parent=11 // pred_check
        %p234 = pneg %p103
      $region22: #{tpu_custom_call.1} parent=11 // pred_check_branch
        %236 = sbr.rel (%p234) target = $region24
      $region23: #{tpu_custom_call.1} parent=11 // pred_region
        _
      $region24: #{tpu_custom_call.1} parent=11 // pred_fallthru
        _
      // Predicated region
      $region25: #{tpu_custom_call.1} parent=11 // pred_check
        %p237 = pneg %p124
      $region26: #{tpu_custom_call.1} parent=11 // pred_check_branch
        %239 = sbr.rel (%p237) target = $region28
      $region27: #{tpu_custom_call.1} parent=11 // pred_region
        _
      $region28: #{tpu_custom_call.1} parent=11 // pred_fallthru
        _
      // Predicated region
      $region29: #{tpu_custom_call.1} parent=11 // pred_check
        %p240 = pneg %p145
      $region30: #{tpu_custom_call.1} parent=11 // pred_check_branch
        %242 = sbr.rel (%p240) target = $region32
      $region31: #{tpu_custom_call.1} parent=11 // pred_region
        _
      $region32: #{tpu_custom_call.1} parent=11 // pred_fallthru
        _
      // Predicated region
      $region33: #{tpu_custom_call.1} parent=11 // pred_check
        %p243 = pneg %p166
      $region34: #{tpu_custom_call.1} parent=11 // pred_check_branch
        %245 = sbr.rel (%p243) target = $region36
      $region35: #{tpu_custom_call.1} parent=11 // pred_region
        _
      $region36: #{tpu_custom_call.1} parent=11 // pred_fallthru
        _
      // Predicated region
      $region37: #{tpu_custom_call.1} parent=11 // pred_check
        %p246 = pneg %p187
      $region38: #{tpu_custom_call.1} parent=11 // pred_check_branch
        %248 = sbr.rel (%p246) target = $region40
      $region39: #{tpu_custom_call.1} parent=11 // pred_region
        _
      $region40: #{tpu_custom_call.1} parent=11 // pred_fallthru
        _
    $region12: #{tpu_custom_call.1} parent=5 // pred_fallthru
      _
    %p249 = scmp.lt.s32.totalorder %s14, 2
    // Predicated region
    $region41: #{tpu_custom_call.1} parent=5 // pred_check
      %p250 = pneg %p249
    $region42: #{tpu_custom_call.1} parent=5 // pred_check_branch
      %252 = sbr.rel (%p250) target = $region44
    $region43: #{tpu_custom_call.1} parent=5 // pred_region
      // Predicated region
      $region45: #{tpu_custom_call.1} parent=43 // pred_check
        %p253 = pneg %p34
      $region46: #{tpu_custom_call.1} parent=43 // pred_check_branch
        %255 = sbr.rel (%p253) target = $region48
      $region47: #{tpu_custom_call.1} parent=43 // pred_region
        %p256 = scmp.lt.s32.totalorder %s14, 1
        %s257 = scalar_select %p256, %s14, 1
        %s258 = smul.addr %s257, 8
        %s259 = smul.addr %s258, 8
        %s260 = scalar_lea.vmem %s0, %s259
      $region48: #{tpu_custom_call.1} parent=43 // pred_fallthru
        _
    $region44: #{tpu_custom_call.1} parent=5 // pred_fallthru
      _
    %p261 = scmp.le.s32.totalorder 1, %s14
    %p262 = scmp.lt.s32.totalorder %s14, 3
    %p263 = pnand %p261, %p262
    %p264 = pneg %p263
    // Predicated region
    $region49: #{tpu_custom_call.1} parent=5 // pred_check
      _
    $region50: #{tpu_custom_call.1} parent=5 // pred_check_branch
      %266 = sbr.rel (%p263) target = $region52
    $region51: #{tpu_custom_call.1} parent=5 // pred_region
      %s267 = ssub.s32 %s14, 1
      %p268 = scmp.lt.s32.totalorder %s19, 1
      %s269 = scalar_select %p268, %s19, 1
      %s270 = smul.addr %s269, 8
      %s271 = smul.addr %s270, 8
      %s272 = scalar_lea.vmem %s0, %s271
      %p273 = pneg %p40
      %p274 = pneg %p37
      %p275 = pneg %p61
      %p276 = pneg %p58
      %p277 = pneg %p82
      %p278 = pneg %p79
      %p279 = pneg %p103
      %p280 = pneg %p100
      %p281 = pneg %p124
      %p282 = pneg %p121
      %p283 = pneg %p145
      %p284 = pneg %p142
      %p285 = pneg %p166
      %p286 = pneg %p163
      %p287 = pneg %p187
      %p288 = pneg %p184
      %p289 = pneg %p213
      %p290 = pneg %p210
      %p291 = scmp.lt.s32.totalorder %s19, 1
      %s292 = scalar_select %p291, %s19, 1
      %s293 = smul.addr %s292, 8
      %s294 = smul.addr %s293, 8
      %s295 = scalar_lea.vmem %s8, %s294
      %p296 = scmp.lt.s32.totalorder %s19, 1
      %s297 = scalar_select %p296, %s19, 1
      %s298 = smul.addr %s297, 8
      %s299 = smul.addr %s298, 8
      %s300 = scalar_lea.vmem %s0, %s299
      %p301 = scmp.lt.s32.totalorder %s19, 1
      %s302 = scalar_select %p301, %s19, 1
      %s303 = smul.addr %s302, 8
      %s304 = smul.addr %s303, 8
      %s305 = scalar_lea.vmem %s8, %s304
      %v306 = vld [vmem:[%s300] sm:$0xff]
      %v307 = vld [vmem:[%s300 + $0x8] sm:$0xff]
      %v308 = vld [vmem:[%s300 + $0x10] sm:$0xff]
      %v309 = vld [vmem:[%s300 + $0x18] sm:$0xff]
      %v310 = vld [vmem:[%s300 + $0x20] sm:$0xff]
      %v311 = vld [vmem:[%s300 + $0x28] sm:$0xff]
      %v312 = vld [vmem:[%s300 + $0x30] sm:$0xff]
      %v313 = vld [vmem:[%s300 + $0x38] sm:$0xff]
      %v314 = vld [vmem:[%s2] sm:$0xff]
      %v315 = vld [vmem:[%s2 + $0x8] sm:$0xff]
      %v316 = vld [vmem:[%s2 + $0x10] sm:$0xff]
      %v317 = vld [vmem:[%s2 + $0x18] sm:$0xff]
      %v318 = vld [vmem:[%s2 + $0x20] sm:$0xf]
      %v319 = vld [vmem:[%s3] sm:$0x1]
      %v321 = vperm.slane %v319, 0
      %vm323 = vcmask 293888
      %v325 = vsel %vm323, %v306, 0
      %v328 = vsel %vm323, %v307, 0
      %v331 = vsel %vm323, %v308, 0
      %v334 = vsel %vm323, %v309, 0
      %v337 = vsel %vm323, %v310, 0
      %v340 = vsel %vm323, %v311, 0
      %v343 = vsel %vm323, %v312, 0
      %v346 = vsel %vm323, %v313, 0
      %vm348 = vcmask 1043456
      %v350 = vsel %vm348, %v318, 0
      %352 = vmatpush.msra.mxu0 0.0
      %353 = vmatpush.msra.mxu0 0.0
      %354 = vmatpush.msra.mxu0 0.0
      %355 = vmatpush.msra.mxu0 0.0
      %356 = vmatpush.msra.mxu0 0.0
      %357 = vmatpush.msra.mxu0 0.0
      %358 = vmatpush.msra.mxu0 0.0
      %359 = vmatpush.msra.mxu0 0.0
      %360 = vmatpush.msra.mxu0 0.0
      %361 = vmatpush.msra.mxu0 0.0
      %362 = vmatpush.msra.mxu0 0.0
      %363 = vmatpush.msra.mxu0 %v350
      %364 = vmatpush.msra.mxu0 %v317
      %365 = vmatpush.msra.mxu0 %v316
      %366 = vmatpush.msra.mxu0 %v315
      %367 = vmatpush.msra.mxu0 %v314
      %368 = vmatmul.f32.gmra.mxu0 %v325
      %v369 = vpop.f32.mrf.mxu0
      %v370 = vadd.f32 %v321, %v369
      %371 = vmatmul.f32.gmra.mxu0 %v328
      %v372 = vpop.f32.mrf.mxu0
      %v373 = vadd.f32 %v321, %v372
      %374 = vmatmul.f32.gmra.mxu0 %v331
      %v375 = vpop.f32.mrf.mxu0
      %v376 = vadd.f32 %v321, %v375
      %377 = vmatmul.f32.gmra.mxu0 %v334
      %v378 = vpop.f32.mrf.mxu0
      %v379 = vadd.f32 %v321, %v378
      %380 = vmatmul.f32.gmra.mxu0 %v337
      %v381 = vpop.f32.mrf.mxu0
      %v382 = vadd.f32 %v321, %v381
      %383 = vmatmul.f32.gmra.mxu0 %v340
      %v384 = vpop.f32.mrf.mxu0
      %v385 = vadd.f32 %v321, %v384
      %386 = vmatmul.f32.gmra.mxu0 %v343
      %v387 = vpop.f32.mrf.mxu0
      %v388 = vadd.f32 %v321, %v387
      %389 = vmatmul.f32.gmra.mxu0 %v346
      %v390 = vpop.f32.mrf.mxu0
      %v391 = vadd.f32 %v321, %v390
      %392 = vdwg.mxu0
      %v393 = vmul.f32 %v370, 0.5
      %v394 = vmul.f32 %v373, 0.5
      %v395 = vmul.f32 %v376, 0.5
      %v396 = vmul.f32 %v379, 0.5
      %v397 = vmul.f32 %v382, 0.5
      %v398 = vmul.f32 %v385, 0.5
      %v399 = vmul.f32 %v388, 0.5
      %v400 = vmul.f32 %v391, 0.5
      %v401 = vmul.f32 %v370, 0.70710677
      %v402 = vmul.f32 %v373, 0.70710677
      %v403 = vmul.f32 %v376, 0.70710677
      %v404 = vmul.f32 %v379, 0.70710677
      %v405 = vmul.f32 %v382, 0.70710677
      %v406 = vmul.f32 %v385, 0.70710677
      %v407 = vmul.f32 %v388, 0.70710677
      %v408 = vmul.f32 %v391, 0.70710677
      %v409 = vmul.f32 %v401, %v401
      %v410 = vmin.f32 16.0, %v409
      %v411 = vmul.f32 %v410, 2.1237322e-06
      %v412 = vadd.f32 %v411, 0.00028619796
      %v413 = vmul.f32 %v410, %v412
      %v414 = vadd.f32 %v413, 0.0036580483
      %v415 = vmul.f32 %v410, %v414
      %v416 = vadd.f32 %v415, 0.05243302
      %v417 = vmul.f32 %v410, %v416
      %v418 = vadd.f32 %v417, 0.18741608
      %v419 = vmul.f32 %v410, %v418
      %v420 = vadd.f32 %v419, 1.1283791
      %v421 = vmul.f32 %v401, %v420
      %v422 = vmul.f32 %v410, 3.8918573e-05
      %v423 = vadd.f32 %v422, 0.001143296
      %v424 = vmul.f32 %v410, %v423
      %v425 = vadd.f32 %v424, 0.014752088
      %v426 = vmul.f32 %v410, %v425
      %v427 = vadd.f32 %v426, 0.112945676
      %v428 = vmul.f32 %v410, %v427
      %v429 = vadd.f32 %v428, 0.4994258
      %v430 = vmul.f32 %v410, %v429
      %v431 = vadd.f32 %v430, 1.0
      %v432 = vrcp.pop %v431
      %v433 = vmul.f32 %v431, %v432
      %v434 = vsub.f32 1.0, %v433
      %v435 = vmul.f32 %v432, %v434
      %v436 = vadd.f32 %v432, %v435
      %vm437 = vweird.f32 %v431
      %vm438 = vweird.f32 %v432
      %vm439 = vmor %vm437, %vm438
      %v440 = vsel %vm439, %v432, %v436
      %v441 = vand.u32 2147483647, %v431
      %vm442 = vcmp.eq.f32.partialorder %v441, 8.507059e+37
      %v443 = vand.u32 %v431, 2147483648
      %v444 = vor.u32 1.1754944e-38, %v443
      %v445 = vsel %vm442, %v444, %v440
      %v446 = vmul.f32 %v421, %v445
      %v447 = vmin.f32 %v446, 1.0
      %v448 = vmax.f32 %v447, -1.0
      %v449 = vmul.f32 %v402, %v402
      %v450 = vmin.f32 16.0, %v449
      %v451 = vmul.f32 %v450, 2.1237322e-06
      %v452 = vadd.f32 %v451, 0.00028619796
      %v453 = vmul.f32 %v450, %v452
      %v454 = vadd.f32 %v453, 0.0036580483
      %v455 = vmul.f32 %v450, %v454
      %v456 = vadd.f32 %v455, 0.05243302
      %v457 = vmul.f32 %v450, %v456
      %v458 = vadd.f32 %v457, 0.18741608
      %v459 = vmul.f32 %v450, %v458
      %v460 = vadd.f32 %v459, 1.1283791
      %v461 = vmul.f32 %v402, %v460
      %v462 = vmul.f32 %v450, 3.8918573e-05
      %v463 = vadd.f32 %v462, 0.001143296
      %v464 = vmul.f32 %v450, %v463
      %v465 = vadd.f32 %v464, 0.014752088
      %v466 = vmul.f32 %v450, %v465
      %v467 = vadd.f32 %v466, 0.112945676
      %v468 = vmul.f32 %v450, %v467
      %v469 = vadd.f32 %v468, 0.4994258
      %v470 = vmul.f32 %v450, %v469
      %v471 = vadd.f32 %v470, 1.0
      %v472 = vrcp.pop %v471
      %v473 = vmul.f32 %v471, %v472
      %v474 = vsub.f32 1.0, %v473
      %v475 = vmul.f32 %v472, %v474
      %v476 = vadd.f32 %v472, %v475
      %vm477 = vweird.f32 %v471
      %vm478 = vweird.f32 %v472
      %vm479 = vmor %vm477, %vm478
      %v480 = vsel %vm479, %v472, %v476
      %v481 = vand.u32 2147483647, %v471
      %vm482 = vcmp.eq.f32.partialorder %v481, 8.507059e+37
      %v483 = vand.u32 %v471, 2147483648
      %v484 = vor.u32 1.1754944e-38, %v483
      %v485 = vsel %vm482, %v484, %v480
      %v486 = vmul.f32 %v461, %v485
      %v487 = vmin.f32 %v486, 1.0
      %v488 = vmax.f32 %v487, -1.0
      %v489 = vmul.f32 %v403, %v403
      %v490 = vmin.f32 16.0, %v489
      %v491 = vmul.f32 %v490, 2.1237322e-06
      %v492 = vadd.f32 %v491, 0.00028619796
      %v493 = vmul.f32 %v490, %v492
      %v494 = vadd.f32 %v493, 0.0036580483
      %v495 = vmul.f32 %v490, %v494
      %v496 = vadd.f32 %v495, 0.05243302
      %v497 = vmul.f32 %v490, %v496
      %v498 = vadd.f32 %v497, 0.18741608
      %v499 = vmul.f32 %v490, %v498
      %v500 = vadd.f32 %v499, 1.1283791
      %v501 = vmul.f32 %v403, %v500
      %v502 = vmul.f32 %v490, 3.8918573e-05
      %v503 = vadd.f32 %v502, 0.001143296
      %v504 = vmul.f32 %v490, %v503
      %v505 = vadd.f32 %v504, 0.014752088
      %v506 = vmul.f32 %v490, %v505
      %v507 = vadd.f32 %v506, 0.112945676
      %v508 = vmul.f32 %v490, %v507
      %v509 = vadd.f32 %v508, 0.4994258
      %v510 = vmul.f32 %v490, %v509
      %v511 = vadd.f32 %v510, 1.0
      %v512 = vrcp.pop %v511
      %v513 = vmul.f32 %v511, %v512
      %v514 = vsub.f32 1.0, %v513
      %v515 = vmul.f32 %v512, %v514
      %v516 = vadd.f32 %v512, %v515
      %vm517 = vweird.f32 %v511
      %vm518 = vweird.f32 %v512
      %vm519 = vmor %vm517, %vm518
      %v520 = vsel %vm519, %v512, %v516
      %v521 = vand.u32 2147483647, %v511
      %vm522 = vcmp.eq.f32.partialorder %v521, 8.507059e+37
      %v523 = vand.u32 %v511, 2147483648
      %v524 = vor.u32 1.1754944e-38, %v523
      %v525 = vsel %vm522, %v524, %v520
      %v526 = vmul.f32 %v501, %v525
      %v527 = vmin.f32 %v526, 1.0
      %v528 = vmax.f32 %v527, -1.0
      %v529 = vmul.f32 %v404, %v404
      %v530 = vmin.f32 16.0, %v529
      %v531 = vmul.f32 %v530, 2.1237322e-06
      %v532 = vadd.f32 %v531, 0.00028619796
      %v533 = vmul.f32 %v530, %v532
      %v534 = vadd.f32 %v533, 0.0036580483
      %v535 = vmul.f32 %v530, %v534
      %v536 = vadd.f32 %v535, 0.05243302
      %v537 = vmul.f32 %v530, %v536
      %v538 = vadd.f32 %v537, 0.18741608
      %v539 = vmul.f32 %v530, %v538
      %v540 = vadd.f32 %v539, 1.1283791
      %v541 = vmul.f32 %v404, %v540
      %v542 = vmul.f32 %v530, 3.8918573e-05
      %v543 = vadd.f32 %v542, 0.001143296
      %v544 = vmul.f32 %v530, %v543
      %v545 = vadd.f32 %v544, 0.014752088
      %v546 = vmul.f32 %v530, %v545
      %v547 = vadd.f32 %v546, 0.112945676
      %v548 = vmul.f32 %v530, %v547
      %v549 = vadd.f32 %v548, 0.4994258
      %v550 = vmul.f32 %v530, %v549
      %v551 = vadd.f32 %v550, 1.0
      %v552 = vrcp.pop %v551
      %v553 = vmul.f32 %v551, %v552
      %v554 = vsub.f32 1.0, %v553
      %v555 = vmul.f32 %v552, %v554
      %v556 = vadd.f32 %v552, %v555
      %vm557 = vweird.f32 %v551
      %vm558 = vweird.f32 %v552
      %vm559 = vmor %vm557, %vm558
      %v560 = vsel %vm559, %v552, %v556
      %v561 = vand.u32 2147483647, %v551
      %vm562 = vcmp.eq.f32.partialorder %v561, 8.507059e+37
      %v563 = vand.u32 %v551, 2147483648
      %v564 = vor.u32 1.1754944e-38, %v563
      %v565 = vsel %vm562, %v564, %v560
      %v566 = vmul.f32 %v541, %v565
      %v567 = vmin.f32 %v566, 1.0
      %v568 = vmax.f32 %v567, -1.0
      %v569 = vmul.f32 %v405, %v405
      %v570 = vmin.f32 16.0, %v569
      %v571 = vmul.f32 %v570, 2.1237322e-06
      %v572 = vadd.f32 %v571, 0.00028619796
      %v573 = vmul.f32 %v570, %v572
      %v574 = vadd.f32 %v573, 0.0036580483
      %v575 = vmul.f32 %v570, %v574
      %v576 = vadd.f32 %v575, 0.05243302
      %v577 = vmul.f32 %v570, %v576
      %v578 = vadd.f32 %v577, 0.18741608
      %v579 = vmul.f32 %v570, %v578
      %v580 = vadd.f32 %v579, 1.1283791
      %v581 = vmul.f32 %v405, %v580
      %v582 = vmul.f32 %v570, 3.8918573e-05
      %v583 = vadd.f32 %v582, 0.001143296
      %v584 = vmul.f32 %v570, %v583
      %v585 = vadd.f32 %v584, 0.014752088
      %v586 = vmul.f32 %v570, %v585
      %v587 = vadd.f32 %v586, 0.112945676
      %v588 = vmul.f32 %v570, %v587
      %v589 = vadd.f32 %v588, 0.4994258
      %v590 = vmul.f32 %v570, %v589
      %v591 = vadd.f32 %v590, 1.0
      %v592 = vrcp.pop %v591
      %v593 = vmul.f32 %v591, %v592
      %v594 = vsub.f32 1.0, %v593
      %v595 = vmul.f32 %v592, %v594
      %v596 = vadd.f32 %v592, %v595
      %vm597 = vweird.f32 %v591
      %vm598 = vweird.f32 %v592
      %vm599 = vmor %vm597, %vm598
      %v600 = vsel %vm599, %v592, %v596
      %v601 = vand.u32 2147483647, %v591
      %vm602 = vcmp.eq.f32.partialorder %v601, 8.507059e+37
      %v603 = vand.u32 %v591, 2147483648
      %v604 = vor.u32 1.1754944e-38, %v603
      %v605 = vsel %vm602, %v604, %v600
      %v606 = vmul.f32 %v581, %v605
      %v607 = vmin.f32 %v606, 1.0
      %v608 = vmax.f32 %v607, -1.0
      %v609 = vmul.f32 %v406, %v406
      %v610 = vmin.f32 16.0, %v609
      %v611 = vmul.f32 %v610, 2.1237322e-06
      %v612 = vadd.f32 %v611, 0.00028619796
      %v613 = vmul.f32 %v610, %v612
      %v614 = vadd.f32 %v613, 0.0036580483
      %v615 = vmul.f32 %v610, %v614
      %v616 = vadd.f32 %v615, 0.05243302
      %v617 = vmul.f32 %v610, %v616
      %v618 = vadd.f32 %v617, 0.18741608
      %v619 = vmul.f32 %v610, %v618
      %v620 = vadd.f32 %v619, 1.1283791
      %v621 = vmul.f32 %v406, %v620
      %v622 = vmul.f32 %v610, 3.8918573e-05
      %v623 = vadd.f32 %v622, 0.001143296
      %v624 = vmul.f32 %v610, %v623
      %v625 = vadd.f32 %v624, 0.014752088
      %v626 = vmul.f32 %v610, %v625
      %v627 = vadd.f32 %v626, 0.112945676
      %v628 = vmul.f32 %v610, %v627
      %v629 = vadd.f32 %v628, 0.4994258
      %v630 = vmul.f32 %v610, %v629
      %v631 = vadd.f32 %v630, 1.0
      %v632 = vrcp.pop %v631
      %v633 = vmul.f32 %v631, %v632
      %v634 = vsub.f32 1.0, %v633
      %v635 = vmul.f32 %v632, %v634
      %v636 = vadd.f32 %v632, %v635
      %vm637 = vweird.f32 %v631
      %vm638 = vweird.f32 %v632
      %vm639 = vmor %vm637, %vm638
      %v640 = vsel %vm639, %v632, %v636
      %v641 = vand.u32 2147483647, %v631
      %vm642 = vcmp.eq.f32.partialorder %v641, 8.507059e+37
      %v643 = vand.u32 %v631, 2147483648
      %v644 = vor.u32 1.1754944e-38, %v643
      %v645 = vsel %vm642, %v644, %v640
      %v646 = vmul.f32 %v621, %v645
      %v647 = vmin.f32 %v646, 1.0
      %v648 = vmax.f32 %v647, -1.0
      %v649 = vmul.f32 %v407, %v407
      %v650 = vmin.f32 16.0, %v649
      %v651 = vmul.f32 %v650, 2.1237322e-06
      %v652 = vadd.f32 %v651, 0.00028619796
      %v653 = vmul.f32 %v650, %v652
      %v654 = vadd.f32 %v653, 0.0036580483
      %v655 = vmul.f32 %v650, %v654
      %v656 = vadd.f32 %v655, 0.05243302
      %v657 = vmul.f32 %v650, %v656
      %v658 = vadd.f32 %v657, 0.18741608
      %v659 = vmul.f32 %v650, %v658
      %v660 = vadd.f32 %v659, 1.1283791
      %v661 = vmul.f32 %v407, %v660
      %v662 = vmul.f32 %v650, 3.8918573e-05
      %v663 = vadd.f32 %v662, 0.001143296
      %v664 = vmul.f32 %v650, %v663
      %v665 = vadd.f32 %v664, 0.014752088
      %v666 = vmul.f32 %v650, %v665
      %v667 = vadd.f32 %v666, 0.112945676
      %v668 = vmul.f32 %v650, %v667
      %v669 = vadd.f32 %v668, 0.4994258
      %v670 = vmul.f32 %v650, %v669
      %v671 = vadd.f32 %v670, 1.0
      %v672 = vrcp.pop %v671
      %v673 = vmul.f32 %v671, %v672
      %v674 = vsub.f32 1.0, %v673
      %v675 = vmul.f32 %v672, %v674
      %v676 = vadd.f32 %v672, %v675
      %vm677 = vweird.f32 %v671
      %vm678 = vweird.f32 %v672
      %vm679 = vmor %vm677, %vm678
      %v680 = vsel %vm679, %v672, %v676
      %v681 = vand.u32 2147483647, %v671
      %vm682 = vcmp.eq.f32.partialorder %v681, 8.507059e+37
      %v683 = vand.u32 %v671, 2147483648
      %v684 = vor.u32 1.1754944e-38, %v683
      %v685 = vsel %vm682, %v684, %v680
      %v686 = vmul.f32 %v661, %v685
      %v687 = vmin.f32 %v686, 1.0
      %v688 = vmax.f32 %v687, -1.0
      %v689 = vmul.f32 %v408, %v408
      %v690 = vmin.f32 16.0, %v689
      %v691 = vmul.f32 %v690, 2.1237322e-06
      %v692 = vadd.f32 %v691, 0.00028619796
      %v693 = vmul.f32 %v690, %v692
      %v694 = vadd.f32 %v693, 0.0036580483
      %v695 = vmul.f32 %v690, %v694
      %v696 = vadd.f32 %v695, 0.05243302
      %v697 = vmul.f32 %v690, %v696
      %v698 = vadd.f32 %v697, 0.18741608
      %v699 = vmul.f32 %v690, %v698
      %v700 = vadd.f32 %v699, 1.1283791
      %v701 = vmul.f32 %v408, %v700
      %v702 = vmul.f32 %v690, 3.8918573e-05
      %v703 = vadd.f32 %v702, 0.001143296
      %v704 = vmul.f32 %v690, %v703
      %v705 = vadd.f32 %v704, 0.014752088
      %v706 = vmul.f32 %v690, %v705
      %v707 = vadd.f32 %v706, 0.112945676
      %v708 = vmul.f32 %v690, %v707
      %v709 = vadd.f32 %v708, 0.4994258
      %v710 = vmul.f32 %v690, %v709
      %v711 = vadd.f32 %v710, 1.0
      %v712 = vrcp.pop %v711
      %v713 = vmul.f32 %v711, %v712
      %v714 = vsub.f32 1.0, %v713
      %v715 = vmul.f32 %v712, %v714
      %v716 = vadd.f32 %v712, %v715
      %vm717 = vweird.f32 %v711
      %vm718 = vweird.f32 %v712
      %vm719 = vmor %vm717, %vm718
      %v720 = vsel %vm719, %v712, %v716
      %v721 = vand.u32 2147483647, %v711
      %vm722 = vcmp.eq.f32.partialorder %v721, 8.507059e+37
      %v723 = vand.u32 %v711, 2147483648
      %v724 = vor.u32 1.1754944e-38, %v723
      %v725 = vsel %vm722, %v724, %v720
      %v726 = vmul.f32 %v701, %v725
      %v727 = vmin.f32 %v726, 1.0
      %v728 = vmax.f32 %v727, -1.0
      %v729 = vadd.f32 %v448, 1.0
      %v730 = vadd.f32 %v488, 1.0
      %v731 = vadd.f32 %v528, 1.0
      %v732 = vadd.f32 %v568, 1.0
      %v733 = vadd.f32 %v608, 1.0
      %v734 = vadd.f32 %v648, 1.0
      %v735 = vadd.f32 %v688, 1.0
      %v736 = vadd.f32 %v728, 1.0
      %v737 = vmul.f32 %v393, %v729
      %v738 = vmul.f32 %v394, %v730
      %v739 = vmul.f32 %v395, %v731
      %v740 = vmul.f32 %v396, %v732
      %v741 = vmul.f32 %v397, %v733
      %v742 = vmul.f32 %v398, %v734
      %v743 = vmul.f32 %v399, %v735
      %v744 = vmul.f32 %v400, %v736
      %vm753 = vcmask 1040384
      %v754 = vrot.slane %v737, 7
      %v755 = vrot.slane %v738, 7
      %v756 = vsel %vm753, %v754, %v755
      %v757 = vrot.slane %v739, 7
      %v758 = vsel %vm753, %v755, %v757
      %v759 = vrot.slane %v740, 7
      %v760 = vsel %vm753, %v757, %v759
      %v761 = vrot.slane %v741, 7
      %v762 = vsel %vm753, %v759, %v761
      %v763 = vrot.slane %v742, 7
      %v764 = vsel %vm753, %v761, %v763
      %v765 = vrot.slane %v743, 7
      %v766 = vsel %vm753, %v763, %v765
      %v767 = vrot.slane %v744, 7
      %v768 = vsel %vm753, %v765, %v767
      %v771 = vsel %vm753, 0.0, %v754
      %v772 = vsel %vm753, %v767, 0.0
      %v773 = vld [vmem:[%s5] sm:$0x1]
      %v775 = vperm.slane %v773, 0
      %v777 = vld [vmem:[%s4] sm:$0xff]
      %s778 = scalar_lea.vmem %s4, 24
      %v779 = vld [vmem:[%s778] sm:$0xff]
      %vm780 = vcmask 64512
      %v782 = vsel %vm780, %v771, 0
      %v784 = vsel %vm780, %v756, 0
      %v786 = vsel %vm780, %v758, 0
      %v788 = vsel %vm780, %v760, 0
      %v790 = vsel %vm780, %v762, 0
      %v792 = vsel %vm780, %v764, 0
      %v794 = vsel %vm780, %v766, 0
      %v796 = vsel %vm780, %v768, 0
      %798 = vmatpush.msra.mxu0 0.0
      %799 = vmatpush.msra.mxu0 0.0
      %800 = vmatpush.msra.mxu0 0.0
      %801 = vmatpush.msra.mxu0 0.0
      %802 = vmatpush.msra.mxu0 0.0
      %803 = vmatpush.msra.mxu0 0.0
      %804 = vmatpush.msra.mxu0 0.0
      %805 = vmatpush.msra.mxu0 0.0
      %806 = vmatpush.msra.mxu0 0.0
      %807 = vmatpush.msra.mxu0 0.0
      %808 = vmatpush.msra.mxu0 0.0
      %809 = vmatpush.msra.mxu0 0.0
      %810 = vmatpush.msra.mxu0 0.0
      %811 = vmatpush.msra.mxu0 0.0
      %812 = vmatpush.msra.mxu0 0.0
      %813 = vmatpush.msra.mxu0 %v779
      %814 = vmatmul.f32.gmra.mxu0 %v782
      %v815 = vpop.f32.mrf.mxu0
      %v816 = vadd.f32 0.0, %v815
      %817 = vmatmul.f32.gmra.mxu0 %v784
      %v818 = vpop.f32.mrf.mxu0
      %v819 = vadd.f32 0.0, %v818
      %820 = vmatmul.f32.gmra.mxu0 %v786
      %v821 = vpop.f32.mrf.mxu0
      %v822 = vadd.f32 0.0, %v821
      %823 = vmatmul.f32.gmra.mxu0 %v788
      %v824 = vpop.f32.mrf.mxu0
      %v825 = vadd.f32 0.0, %v824
      %826 = vmatmul.f32.gmra.mxu0 %v790
      %v827 = vpop.f32.mrf.mxu0
      %v828 = vadd.f32 0.0, %v827
      %829 = vmatmul.f32.gmra.mxu0 %v792
      %v830 = vpop.f32.mrf.mxu0
      %v831 = vadd.f32 0.0, %v830
      %832 = vmatmul.f32.gmra.mxu0 %v794
      %v833 = vpop.f32.mrf.mxu0
      %v834 = vadd.f32 0.0, %v833
      %835 = vmatmul.f32.gmra.mxu0 %v796
      %v836 = vpop.f32.mrf.mxu0
      %v837 = vadd.f32 0.0, %v836
      %838 = vdwg.mxu0
      %v840 = vsel %vm780, 0.0, 0
      %842 = vmatpush.msra.mxu0 0.0
      %843 = vmatpush.msra.mxu0 0.0
      %844 = vmatpush.msra.mxu0 0.0
      %845 = vmatpush.msra.mxu0 0.0
      %846 = vmatpush.msra.mxu0 0.0
      %847 = vmatpush.msra.mxu0 0.0
      %848 = vmatpush.msra.mxu0 0.0
      %849 = vmatpush.msra.mxu0 0.0
      %850 = vmatpush.msra.mxu0 0.0
      %851 = vmatpush.msra.mxu0 0.0
      %852 = vmatpush.msra.mxu0 0.0
      %853 = vmatpush.msra.mxu0 0.0
      %854 = vmatpush.msra.mxu0 0.0
      %855 = vmatpush.msra.mxu0 0.0
      %856 = vmatpush.msra.mxu0 0.0
      %857 = vmatpush.msra.mxu0 %v777
      %858 = vmatmul.f32.gmra.mxu0 %v840
      %v859 = vpop.f32.mrf.mxu0
      %v860 = vadd.f32 %v816, %v859
      %861 = vmatmul.f32.gmra.mxu0 %v782
      %v862 = vpop.f32.mrf.mxu0
      %v863 = vadd.f32 %v819, %v862
      %864 = vmatmul.f32.gmra.mxu0 %v784
      %v865 = vpop.f32.mrf.mxu0
      %v866 = vadd.f32 %v822, %v865
      %867 = vmatmul.f32.gmra.mxu0 %v786
      %v868 = vpop.f32.mrf.mxu0
      %v869 = vadd.f32 %v825, %v868
      %870 = vmatmul.f32.gmra.mxu0 %v788
      %v871 = vpop.f32.mrf.mxu0
      %v872 = vadd.f32 %v828, %v871
      %873 = vmatmul.f32.gmra.mxu0 %v790
      %v874 = vpop.f32.mrf.mxu0
      %v875 = vadd.f32 %v831, %v874
      %876 = vmatmul.f32.gmra.mxu0 %v792
      %v877 = vpop.f32.mrf.mxu0
      %v878 = vadd.f32 %v834, %v877
      %879 = vmatmul.f32.gmra.mxu0 %v794
      %v880 = vpop.f32.mrf.mxu0
      %v881 = vadd.f32 %v837, %v880
      %882 = vdwg.mxu0
      %s883 = scalar_lea.vmem %s4, 48
      %v884 = vld [vmem:[%s883] sm:$0xff]
      %v886 = vsel %vm780, %v772, 0
      %888 = vmatpush.msra.mxu0 0.0
      %889 = vmatpush.msra.mxu0 0.0
      %890 = vmatpush.msra.mxu0 0.0
      %891 = vmatpush.msra.mxu0 0.0
      %892 = vmatpush.msra.mxu0 0.0
      %893 = vmatpush.msra.mxu0 0.0
      %894 = vmatpush.msra.mxu0 0.0
      %895 = vmatpush.msra.mxu0 0.0
      %896 = vmatpush.msra.mxu0 0.0
      %897 = vmatpush.msra.mxu0 0.0
      %898 = vmatpush.msra.mxu0 0.0
      %899 = vmatpush.msra.mxu0 0.0
      %900 = vmatpush.msra.mxu0 0.0
      %901 = vmatpush.msra.mxu0 0.0
      %902 = vmatpush.msra.mxu0 0.0
      %903 = vmatpush.msra.mxu0 %v884
      %904 = vmatmul.f32.gmra.mxu0 %v784
      %v905 = vpop.f32.mrf.mxu0
      %v906 = vadd.f32 0.0, %v905
      %907 = vmatmul.f32.gmra.mxu0 %v786
      %v908 = vpop.f32.mrf.mxu0
      %v909 = vadd.f32 0.0, %v908
      %910 = vmatmul.f32.gmra.mxu0 %v788
      %v911 = vpop.f32.mrf.mxu0
      %v912 = vadd.f32 0.0, %v911
      %913 = vmatmul.f32.gmra.mxu0 %v790
      %v914 = vpop.f32.mrf.mxu0
      %v915 = vadd.f32 0.0, %v914
      %916 = vmatmul.f32.gmra.mxu0 %v792
      %v917 = vpop.f32.mrf.mxu0
      %v918 = vadd.f32 0.0, %v917
      %919 = vmatmul.f32.gmra.mxu0 %v794
      %v920 = vpop.f32.mrf.mxu0
      %v921 = vadd.f32 0.0, %v920
      %922 = vmatmul.f32.gmra.mxu0 %v796
      %v923 = vpop.f32.mrf.mxu0
      %v924 = vadd.f32 0.0, %v923
      %925 = vmatmul.f32.gmra.mxu0 %v886
      %v926 = vpop.f32.mrf.mxu0
      %v927 = vadd.f32 0.0, %v926
      %928 = vdwg.mxu0
      %v929 = vadd.f32 %v860, %v906
      %v930 = vadd.f32 %v863, %v909
      %v931 = vadd.f32 %v866, %v912
      %v932 = vadd.f32 %v869, %v915
      %v933 = vadd.f32 %v872, %v918
      %v934 = vadd.f32 %v875, %v921
      %v935 = vadd.f32 %v878, %v924
      %v936 = vadd.f32 %v881, %v927
      %v937 = vld [vmem:[%s1] sm:$0xff]
      %v938 = vld [vmem:[%s1 + $0x8] sm:$0xff]
      %v939 = vld [vmem:[%s1 + $0x10] sm:$0xff]
      %v940 = vld [vmem:[%s1 + $0x18] sm:$0xff]
      %v941 = vld [vmem:[%s1 + $0x20] sm:$0xff]
      %v942 = vld [vmem:[%s1 + $0x28] sm:$0xff]
      %v943 = vld [vmem:[%s1 + $0x30] sm:$0xff]
      %v944 = vld [vmem:[%s1 + $0x38] sm:$0xff]
      %946 = vset.pattern.permute.xlu0 0
      %947 = vperm.xlu0 %946, %v937
      %v948 = vpop.permute.xlu0 %947
      %951 = vset.pattern.permute.xlu0 0
      %952 = vperm.xlu0 %951, %v938
      %v953 = vpop.permute.xlu0 %952
      %956 = vset.pattern.permute.xlu0 0
      %957 = vperm.xlu0 %956, %v939
      %v958 = vpop.permute.xlu0 %957
      %961 = vset.pattern.permute.xlu0 0
      %962 = vperm.xlu0 %961, %v940
      %v963 = vpop.permute.xlu0 %962
      %966 = vset.pattern.permute.xlu0 0
      %967 = vperm.xlu0 %966, %v941
      %v968 = vpop.permute.xlu0 %967
      %971 = vset.pattern.permute.xlu0 0
      %972 = vperm.xlu0 %971, %v942
      %v973 = vpop.permute.xlu0 %972
      %976 = vset.pattern.permute.xlu0 0
      %977 = vperm.xlu0 %976, %v943
      %v978 = vpop.permute.xlu0 %977
      %981 = vset.pattern.permute.xlu0 0
      %982 = vperm.xlu0 %981, %v944
      %v983 = vpop.permute.xlu0 %982
      %v985 = vmul.f32 %v929, %v948
      %v986 = vmul.f32 %v930, %v953
      %v987 = vmul.f32 %v931, %v958
      %v988 = vmul.f32 %v932, %v963
      %v989 = vmul.f32 %v933, %v968
      %v990 = vmul.f32 %v934, %v973
      %v991 = vmul.f32 %v935, %v978
      %v992 = vmul.f32 %v936, %v983
      %v993 = vadd.f32 %v775, %v985
      %v994 = vadd.f32 %v775, %v986
      %v995 = vadd.f32 %v775, %v987
      %v996 = vadd.f32 %v775, %v988
      %v997 = vadd.f32 %v775, %v989
      %v998 = vadd.f32 %v775, %v990
      %v999 = vadd.f32 %v775, %v991
      %v1000 = vadd.f32 %v775, %v992
      %s1001 = scalar_lea.vmem %s4, 8
      %v1002 = vld [vmem:[%s1001] sm:$0xff]
      %s1003 = scalar_lea.vmem %s4, 32
      %v1004 = vld [vmem:[%s1003] sm:$0xff]
      %vm1005 = vcmask 1046528
      %v1006 = vrot.slane %v771, 1
      %v1007 = vrot.slane %v756, 1
      %v1008 = vsel %vm1005, %v1006, %v1007
      %v1009 = vrot.slane %v758, 1
      %v1010 = vsel %vm1005, %v1007, %v1009
      %v1011 = vrot.slane %v760, 1
      %v1012 = vsel %vm1005, %v1009, %v1011
      %v1013 = vrot.slane %v762, 1
      %v1014 = vsel %vm1005, %v1011, %v1013
      %v1015 = vrot.slane %v764, 1
      %v1016 = vsel %vm1005, %v1013, %v1015
      %v1017 = vrot.slane %v766, 1
      %v1018 = vsel %vm1005, %v1015, %v1017
      %v1019 = vrot.slane %v768, 1
      %v1020 = vsel %vm1005, %v1017, %v1019
      %v1021 = vrot.slane %v772, 1
      %v1022 = vsel %vm1005, %v1019, %v1021
      %v1023 = vsel %vm780, %v1008, 0
      %v1025 = vsel %vm780, %v1010, 0
      %v1027 = vsel %vm780, %v1012, 0
      %v1029 = vsel %vm780, %v1014, 0
      %v1031 = vsel %vm780, %v1016, 0
      %v1033 = vsel %vm780, %v1018, 0
      %v1035 = vsel %vm780, %v1020, 0
      %v1037 = vsel %vm780, %v1022, 0
      %1039 = vmatpush.msra.mxu0 0.0
      %1040 = vmatpush.msra.mxu0 0.0
      %1041 = vmatpush.msra.mxu0 0.0
      %1042 = vmatpush.msra.mxu0 0.0
      %1043 = vmatpush.msra.mxu0 0.0
      %1044 = vmatpush.msra.mxu0 0.0
      %1045 = vmatpush.msra.mxu0 0.0
      %1046 = vmatpush.msra.mxu0 0.0
      %1047 = vmatpush.msra.mxu0 0.0
      %1048 = vmatpush.msra.mxu0 0.0
      %1049 = vmatpush.msra.mxu0 0.0
      %1050 = vmatpush.msra.mxu0 0.0
      %1051 = vmatpush.msra.mxu0 0.0
      %1052 = vmatpush.msra.mxu0 0.0
      %1053 = vmatpush.msra.mxu0 0.0
      %1054 = vmatpush.msra.mxu0 %v1004
      %1055 = vmatmul.f32.gmra.mxu0 %v1023
      %v1056 = vpop.f32.mrf.mxu0
      %v1057 = vadd.f32 0.0, %v1056
      %1058 = vmatmul.f32.gmra.mxu0 %v1025
      %v1059 = vpop.f32.mrf.mxu0
      %v1060 = vadd.f32 0.0, %v1059
      %1061 = vmatmul.f32.gmra.mxu0 %v1027
      %v1062 = vpop.f32.mrf.mxu0
      %v1063 = vadd.f32 0.0, %v1062
      %1064 = vmatmul.f32.gmra.mxu0 %v1029
      %v1065 = vpop.f32.mrf.mxu0
      %v1066 = vadd.f32 0.0, %v1065
      %1067 = vmatmul.f32.gmra.mxu0 %v1031
      %v1068 = vpop.f32.mrf.mxu0
      %v1069 = vadd.f32 0.0, %v1068
      %1070 = vmatmul.f32.gmra.mxu0 %v1033
      %v1071 = vpop.f32.mrf.mxu0
      %v1072 = vadd.f32 0.0, %v1071
      %1073 = vmatmul.f32.gmra.mxu0 %v1035
      %v1074 = vpop.f32.mrf.mxu0
      %v1075 = vadd.f32 0.0, %v1074
      %1076 = vmatmul.f32.gmra.mxu0 %v1037
      %v1077 = vpop.f32.mrf.mxu0
      %v1078 = vadd.f32 0.0, %v1077
      %1079 = vdwg.mxu0
      %v1080 = vrot.slane 0.0, 1
      %v1081 = vsel %vm1005, %v1080, %v1006
      %v1082 = vsel %vm780, %v1081, 0
      %1084 = vmatpush.msra.mxu0 0.0
      %1085 = vmatpush.msra.mxu0 0.0
      %1086 = vmatpush.msra.mxu0 0.0
      %1087 = vmatpush.msra.mxu0 0.0
      %1088 = vmatpush.msra.mxu0 0.0
      %1089 = vmatpush.msra.mxu0 0.0
      %1090 = vmatpush.msra.mxu0 0.0
      %1091 = vmatpush.msra.mxu0 0.0
      %1092 = vmatpush.msra.mxu0 0.0
      %1093 = vmatpush.msra.mxu0 0.0
      %1094 = vmatpush.msra.mxu0 0.0
      %1095 = vmatpush.msra.mxu0 0.0
      %1096 = vmatpush.msra.mxu0 0.0
      %1097 = vmatpush.msra.mxu0 0.0
      %1098 = vmatpush.msra.mxu0 0.0
      %1099 = vmatpush.msra.mxu0 %v1002
      %1100 = vmatmul.f32.gmra.mxu0 %v1082
      %v1101 = vpop.f32.mrf.mxu0
      %v1102 = vadd.f32 %v1057, %v1101
      %1103 = vmatmul.f32.gmra.mxu0 %v1023
      %v1104 = vpop.f32.mrf.mxu0
      %v1105 = vadd.f32 %v1060, %v1104
      %1106 = vmatmul.f32.gmra.mxu0 %v1025
      %v1107 = vpop.f32.mrf.mxu0
      %v1108 = vadd.f32 %v1063, %v1107
      %1109 = vmatmul.f32.gmra.mxu0 %v1027
      %v1110 = vpop.f32.mrf.mxu0
      %v1111 = vadd.f32 %v1066, %v1110
      %1112 = vmatmul.f32.gmra.mxu0 %v1029
      %v1113 = vpop.f32.mrf.mxu0
      %v1114 = vadd.f32 %v1069, %v1113
      %1115 = vmatmul.f32.gmra.mxu0 %v1031
      %v1116 = vpop.f32.mrf.mxu0
      %v1117 = vadd.f32 %v1072, %v1116
      %1118 = vmatmul.f32.gmra.mxu0 %v1033
      %v1119 = vpop.f32.mrf.mxu0
      %v1120 = vadd.f32 %v1075, %v1119
      %1121 = vmatmul.f32.gmra.mxu0 %v1035
      %v1122 = vpop.f32.mrf.mxu0
      %v1123 = vadd.f32 %v1078, %v1122
      %1124 = vdwg.mxu0
      %s1125 = scalar_lea.vmem %s4, 56
      %v1126 = vld [vmem:[%s1125] sm:$0xff]
      %v1127 = vsel %vm1005, %v1021, %v1080
      %v1128 = vsel %vm780, %v1127, 0
      %1130 = vmatpush.msra.mxu0 0.0
      %1131 = vmatpush.msra.mxu0 0.0
      %1132 = vmatpush.msra.mxu0 0.0
      %1133 = vmatpush.msra.mxu0 0.0
      %1134 = vmatpush.msra.mxu0 0.0
      %1135 = vmatpush.msra.mxu0 0.0
      %1136 = vmatpush.msra.mxu0 0.0
      %1137 = vmatpush.msra.mxu0 0.0
      %1138 = vmatpush.msra.mxu0 0.0
      %1139 = vmatpush.msra.mxu0 0.0
      %1140 = vmatpush.msra.mxu0 0.0
      %1141 = vmatpush.msra.mxu0 0.0
      %1142 = vmatpush.msra.mxu0 0.0
      %1143 = vmatpush.msra.mxu0 0.0
      %1144 = vmatpush.msra.mxu0 0.0
      %1145 = vmatpush.msra.mxu0 %v1126
      %1146 = vmatmul.f32.gmra.mxu0 %v1025
      %v1147 = vpop.f32.mrf.mxu0
      %v1148 = vadd.f32 0.0, %v1147
      %1149 = vmatmul.f32.gmra.mxu0 %v1027
      %v1150 = vpop.f32.mrf.mxu0
      %v1151 = vadd.f32 0.0, %v1150
      %1152 = vmatmul.f32.gmra.mxu0 %v1029
      %v1153 = vpop.f32.mrf.mxu0
      %v1154 = vadd.f32 0.0, %v1153
      %1155 = vmatmul.f32.gmra.mxu0 %v1031
      %v1156 = vpop.f32.mrf.mxu0
      %v1157 = vadd.f32 0.0, %v1156
      %1158 = vmatmul.f32.gmra.mxu0 %v1033
      %v1159 = vpop.f32.mrf.mxu0
      %v1160 = vadd.f32 0.0, %v1159
      %1161 = vmatmul.f32.gmra.mxu0 %v1035
      %v1162 = vpop.f32.mrf.mxu0
      %v1163 = vadd.f32 0.0, %v1162
      %1164 = vmatmul.f32.gmra.mxu0 %v1037
      %v1165 = vpop.f32.mrf.mxu0
      %v1166 = vadd.f32 0.0, %v1165
      %1167 = vmatmul.f32.gmra.mxu0 %v1128
      %v1168 = vpop.f32.mrf.mxu0
      %v1169 = vadd.f32 0.0, %v1168
      %1170 = vdwg.mxu0
      %v1171 = vadd.f32 %v1102, %v1148
      %v1172 = vadd.f32 %v1105, %v1151
      %v1173 = vadd.f32 %v1108, %v1154
      %v1174 = vadd.f32 %v1111, %v1157
      %v1175 = vadd.f32 %v1114, %v1160
      %v1176 = vadd.f32 %v1117, %v1163
      %v1177 = vadd.f32 %v1120, %v1166
      %v1178 = vadd.f32 %v1123, %v1169
      %v1179 = vadd.f32 %v993, %v1171
      %v1180 = vadd.f32 %v994, %v1172
      %v1181 = vadd.f32 %v995, %v1173
      %v1182 = vadd.f32 %v996, %v1174
      %v1183 = vadd.f32 %v997, %v1175
      %v1184 = vadd.f32 %v998, %v1176
      %v1185 = vadd.f32 %v999, %v1177
      %v1186 = vadd.f32 %v1000, %v1178
      %s1187 = scalar_lea.vmem %s4, 16
      %v1188 = vld [vmem:[%s1187] sm:$0xff]
      %s1189 = scalar_lea.vmem %s4, 40
      %v1190 = vld [vmem:[%s1189] sm:$0xff]
      %vm1191 = vcmask 1045504
      %v1192 = vrot.slane %v771, 2
      %v1193 = vrot.slane %v756, 2
      %v1194 = vsel %vm1191, %v1192, %v1193
      %v1195 = vrot.slane %v758, 2
      %v1196 = vsel %vm1191, %v1193, %v1195
      %v1197 = vrot.slane %v760, 2
      %v1198 = vsel %vm1191, %v1195, %v1197
      %v1199 = vrot.slane %v762, 2
      %v1200 = vsel %vm1191, %v1197, %v1199
      %v1201 = vrot.slane %v764, 2
      %v1202 = vsel %vm1191, %v1199, %v1201
      %v1203 = vrot.slane %v766, 2
      %v1204 = vsel %vm1191, %v1201, %v1203
      %v1205 = vrot.slane %v768, 2
      %v1206 = vsel %vm1191, %v1203, %v1205
      %v1207 = vrot.slane %v772, 2
      %v1208 = vsel %vm1191, %v1205, %v1207
      %v1209 = vsel %vm780, %v1194, 0
      %v1211 = vsel %vm780, %v1196, 0
      %v1213 = vsel %vm780, %v1198, 0
      %v1215 = vsel %vm780, %v1200, 0
      %v1217 = vsel %vm780, %v1202, 0
      %v1219 = vsel %vm780, %v1204, 0
      %v1221 = vsel %vm780, %v1206, 0
      %v1223 = vsel %vm780, %v1208, 0
      %1225 = vmatpush.msra.mxu0 0.0
      %1226 = vmatpush.msra.mxu0 0.0
      %1227 = vmatpush.msra.mxu0 0.0
      %1228 = vmatpush.msra.mxu0 0.0
      %1229 = vmatpush.msra.mxu0 0.0
      %1230 = vmatpush.msra.mxu0 0.0
      %1231 = vmatpush.msra.mxu0 0.0
      %1232 = vmatpush.msra.mxu0 0.0
      %1233 = vmatpush.msra.mxu0 0.0
      %1234 = vmatpush.msra.mxu0 0.0
      %1235 = vmatpush.msra.mxu0 0.0
      %1236 = vmatpush.msra.mxu0 0.0
      %1237 = vmatpush.msra.mxu0 0.0
      %1238 = vmatpush.msra.mxu0 0.0
      %1239 = vmatpush.msra.mxu0 0.0
      %1240 = vmatpush.msra.mxu0 %v1190
      %1241 = vmatmul.f32.gmra.mxu0 %v1209
      %v1242 = vpop.f32.mrf.mxu0
      %v1243 = vadd.f32 0.0, %v1242
      %1244 = vmatmul.f32.gmra.mxu0 %v1211
      %v1245 = vpop.f32.mrf.mxu0
      %v1246 = vadd.f32 0.0, %v1245
      %1247 = vmatmul.f32.gmra.mxu0 %v1213
      %v1248 = vpop.f32.mrf.mxu0
      %v1249 = vadd.f32 0.0, %v1248
      %1250 = vmatmul.f32.gmra.mxu0 %v1215
      %v1251 = vpop.f32.mrf.mxu0
      %v1252 = vadd.f32 0.0, %v1251
      %1253 = vmatmul.f32.gmra.mxu0 %v1217
      %v1254 = vpop.f32.mrf.mxu0
      %v1255 = vadd.f32 0.0, %v1254
      %1256 = vmatmul.f32.gmra.mxu0 %v1219
      %v1257 = vpop.f32.mrf.mxu0
      %v1258 = vadd.f32 0.0, %v1257
      %1259 = vmatmul.f32.gmra.mxu0 %v1221
      %v1260 = vpop.f32.mrf.mxu0
      %v1261 = vadd.f32 0.0, %v1260
      %1262 = vmatmul.f32.gmra.mxu0 %v1223
      %v1263 = vpop.f32.mrf.mxu0
      %v1264 = vadd.f32 0.0, %v1263
      %1265 = vdwg.mxu0
      %v1266 = vrot.slane 0.0, 2
      %v1267 = vsel %vm1191, %v1266, %v1192
      %v1268 = vsel %vm780, %v1267, 0
      %1270 = vmatpush.msra.mxu0 0.0
      %1271 = vmatpush.msra.mxu0 0.0
      %1272 = vmatpush.msra.mxu0 0.0
      %1273 = vmatpush.msra.mxu0 0.0
      %1274 = vmatpush.msra.mxu0 0.0
      %1275 = vmatpush.msra.mxu0 0.0
      %1276 = vmatpush.msra.mxu0 0.0
      %1277 = vmatpush.msra.mxu0 0.0
      %1278 = vmatpush.msra.mxu0 0.0
      %1279 = vmatpush.msra.mxu0 0.0
      %1280 = vmatpush.msra.mxu0 0.0
      %1281 = vmatpush.msra.mxu0 0.0
      %1282 = vmatpush.msra.mxu0 0.0
      %1283 = vmatpush.msra.mxu0 0.0
      %1284 = vmatpush.msra.mxu0 0.0
      %1285 = vmatpush.msra.mxu0 %v1188
      %1286 = vmatmul.f32.gmra.mxu0 %v1268
      %v1287 = vpop.f32.mrf.mxu0
      %v1288 = vadd.f32 %v1243, %v1287
      %1289 = vmatmul.f32.gmra.mxu0 %v1209
      %v1290 = vpop.f32.mrf.mxu0
      %v1291 = vadd.f32 %v1246, %v1290
      %1292 = vmatmul.f32.gmra.mxu0 %v1211
      %v1293 = vpop.f32.mrf.mxu0
      %v1294 = vadd.f32 %v1249, %v1293
      %1295 = vmatmul.f32.gmra.mxu0 %v1213
      %v1296 = vpop.f32.mrf.mxu0
      %v1297 = vadd.f32 %v1252, %v1296
      %1298 = vmatmul.f32.gmra.mxu0 %v1215
      %v1299 = vpop.f32.mrf.mxu0
      %v1300 = vadd.f32 %v1255, %v1299
      %1301 = vmatmul.f32.gmra.mxu0 %v1217
      %v1302 = vpop.f32.mrf.mxu0
      %v1303 = vadd.f32 %v1258, %v1302
      %1304 = vmatmul.f32.gmra.mxu0 %v1219
      %v1305 = vpop.f32.mrf.mxu0
      %v1306 = vadd.f32 %v1261, %v1305
      %1307 = vmatmul.f32.gmra.mxu0 %v1221
      %v1308 = vpop.f32.mrf.mxu0
      %v1309 = vadd.f32 %v1264, %v1308
      %1310 = vdwg.mxu0
      %s1311 = scalar_lea.vmem %s4, 64
      %v1312 = vld [vmem:[%s1311] sm:$0xff]
      %v1313 = vsel %vm1191, %v1207, %v1266
      %v1314 = vsel %vm780, %v1313, 0
      %1316 = vmatpush.msra.mxu0 0.0
      %1317 = vmatpush.msra.mxu0 0.0
      %1318 = vmatpush.msra.mxu0 0.0
      %1319 = vmatpush.msra.mxu0 0.0
      %1320 = vmatpush.msra.mxu0 0.0
      %1321 = vmatpush.msra.mxu0 0.0
      %1322 = vmatpush.msra.mxu0 0.0
      %1323 = vmatpush.msra.mxu0 0.0
      %1324 = vmatpush.msra.mxu0 0.0
      %1325 = vmatpush.msra.mxu0 0.0
      %1326 = vmatpush.msra.mxu0 0.0
      %1327 = vmatpush.msra.mxu0 0.0
      %1328 = vmatpush.msra.mxu0 0.0
      %1329 = vmatpush.msra.mxu0 0.0
      %1330 = vmatpush.msra.mxu0 0.0
      %1331 = vmatpush.msra.mxu0 %v1312
      %1332 = vmatmul.f32.gmra.mxu0 %v1211
      %v1333 = vpop.f32.mrf.mxu0
      %v1334 = vadd.f32 0.0, %v1333
      %1335 = vmatmul.f32.gmra.mxu0 %v1213
      %v1336 = vpop.f32.mrf.mxu0
      %v1337 = vadd.f32 0.0, %v1336
      %1338 = vmatmul.f32.gmra.mxu0 %v1215
      %v1339 = vpop.f32.mrf.mxu0
      %v1340 = vadd.f32 0.0, %v1339
      %1341 = vmatmul.f32.gmra.mxu0 %v1217
      %v1342 = vpop.f32.mrf.mxu0
      %v1343 = vadd.f32 0.0, %v1342
      %1344 = vmatmul.f32.gmra.mxu0 %v1219
      %v1345 = vpop.f32.mrf.mxu0
      %v1346 = vadd.f32 0.0, %v1345
      %1347 = vmatmul.f32.gmra.mxu0 %v1221
      %v1348 = vpop.f32.mrf.mxu0
      %v1349 = vadd.f32 0.0, %v1348
      %1350 = vmatmul.f32.gmra.mxu0 %v1223
      %v1351 = vpop.f32.mrf.mxu0
      %v1352 = vadd.f32 0.0, %v1351
      %1353 = vmatmul.f32.gmra.mxu0 %v1314
      %v1354 = vpop.f32.mrf.mxu0
      %v1355 = vadd.f32 0.0, %v1354
      %1356 = vdwg.mxu0
      %v1357 = vadd.f32 %v1288, %v1334
      %v1358 = vadd.f32 %v1291, %v1337
      %v1359 = vadd.f32 %v1294, %v1340
      %v1360 = vadd.f32 %v1297, %v1343
      %v1361 = vadd.f32 %v1300, %v1346
      %v1362 = vadd.f32 %v1303, %v1349
      %v1363 = vadd.f32 %v1306, %v1352
      %v1364 = vadd.f32 %v1309, %v1355
      %s1365 = scalar_lea.vmem %s1, 64
      %v1366 = vld [vmem:[%s1365] sm:$0xff]
      %v1367 = vld [vmem:[%s1365 + $0x8] sm:$0xff]
      %v1368 = vld [vmem:[%s1365 + $0x10] sm:$0xff]
      %v1369 = vld [vmem:[%s1365 + $0x18] sm:$0xff]
      %v1370 = vld [vmem:[%s1365 + $0x20] sm:$0xff]
      %v1371 = vld [vmem:[%s1365 + $0x28] sm:$0xff]
      %v1372 = vld [vmem:[%s1365 + $0x30] sm:$0xff]
      %v1373 = vld [vmem:[%s1365 + $0x38] sm:$0xff]
      %1375 = vset.pattern.permute.xlu0 0
      %1376 = vperm.xlu0 %1375, %v1366
      %v1377 = vpop.permute.xlu0 %1376
      %1380 = vset.pattern.permute.xlu0 0
      %1381 = vperm.xlu0 %1380, %v1367
      %v1382 = vpop.permute.xlu0 %1381
      %1385 = vset.pattern.permute.xlu0 0
      %1386 = vperm.xlu0 %1385, %v1368
      %v1387 = vpop.permute.xlu0 %1386
      %1390 = vset.pattern.permute.xlu0 0
      %1391 = vperm.xlu0 %1390, %v1369
      %v1392 = vpop.permute.xlu0 %1391
      %1395 = vset.pattern.permute.xlu0 0
      %1396 = vperm.xlu0 %1395, %v1370
      %v1397 = vpop.permute.xlu0 %1396
      %1400 = vset.pattern.permute.xlu0 0
      %1401 = vperm.xlu0 %1400, %v1371
      %v1402 = vpop.permute.xlu0 %1401
      %1405 = vset.pattern.permute.xlu0 0
      %1406 = vperm.xlu0 %1405, %v1372
      %v1407 = vpop.permute.xlu0 %1406
      %1410 = vset.pattern.permute.xlu0 0
      %1411 = vperm.xlu0 %1410, %v1373
      %v1412 = vpop.permute.xlu0 %1411
      %v1414 = vmul.f32 %v1357, %v1377
      %v1415 = vmul.f32 %v1358, %v1382
      %v1416 = vmul.f32 %v1359, %v1387
      %v1417 = vmul.f32 %v1360, %v1392
      %v1418 = vmul.f32 %v1361, %v1397
      %v1419 = vmul.f32 %v1362, %v1402
      %v1420 = vmul.f32 %v1363, %v1407
      %v1421 = vmul.f32 %v1364, %v1412
      %v1422 = vadd.f32 %v1179, %v1414
      %v1423 = vadd.f32 %v1180, %v1415
      %v1424 = vadd.f32 %v1181, %v1416
      %v1425 = vadd.f32 %v1182, %v1417
      %v1426 = vadd.f32 %v1183, %v1418
      %v1427 = vadd.f32 %v1184, %v1419
      %v1428 = vadd.f32 %v1185, %v1420
      %v1429 = vadd.f32 %v1186, %v1421
      %v1430 = vld [vmem:[%s6] sm:$0xf]
      %v1431 = vld [vmem:[%s7] sm:$0x1]
      %v1433 = vperm.slane %v1431, 0
      %vm1435 = vcmask 31744
      %v1436 = vsel %vm1435, %v306, 0
      %v1438 = vsel %vm1435, %v307, 0
      %v1440 = vsel %vm1435, %v308, 0
      %v1442 = vsel %vm1435, %v309, 0
      %v1444 = vsel %vm1435, %v310, 0
      %v1446 = vsel %vm1435, %v311, 0
      %v1448 = vsel %vm1435, %v312, 0
      %v1450 = vsel %vm1435, %v313, 0
      %v1453 = vsel %vm348, %v1430, 0
      %1455 = vmatpush.msra.mxu0 0.0
      %1456 = vmatpush.msra.mxu0 0.0
      %1457 = vmatpush.msra.mxu0 0.0
      %1458 = vmatpush.msra.mxu0 0.0
      %1459 = vmatpush.msra.mxu0 0.0
      %1460 = vmatpush.msra.mxu0 0.0
      %1461 = vmatpush.msra.mxu0 0.0
      %1462 = vmatpush.msra.mxu0 0.0
      %1463 = vmatpush.msra.mxu0 0.0
      %1464 = vmatpush.msra.mxu0 0.0
      %1465 = vmatpush.msra.mxu0 0.0
      %1466 = vmatpush.msra.mxu0 0.0
      %1467 = vmatpush.msra.mxu0 0.0
      %1468 = vmatpush.msra.mxu0 0.0
      %1469 = vmatpush.msra.mxu0 0.0
      %1470 = vmatpush.msra.mxu0 %v1453
      %1471 = vmatmul.f32.gmra.mxu0 %v1436
      %v1472 = vpop.f32.mrf.mxu0
      %v1473 = vadd.f32 %v1433, %v1472
      %1474 = vmatmul.f32.gmra.mxu0 %v1438
      %v1475 = vpop.f32.mrf.mxu0
      %v1476 = vadd.f32 %v1433, %v1475
      %1477 = vmatmul.f32.gmra.mxu0 %v1440
      %v1478 = vpop.f32.mrf.mxu0
      %v1479 = vadd.f32 %v1433, %v1478
      %1480 = vmatmul.f32.gmra.mxu0 %v1442
      %v1481 = vpop.f32.mrf.mxu0
      %v1482 = vadd.f32 %v1433, %v1481
      %1483 = vmatmul.f32.gmra.mxu0 %v1444
      %v1484 = vpop.f32.mrf.mxu0
      %v1485 = vadd.f32 %v1433, %v1484
      %1486 = vmatmul.f32.gmra.mxu0 %v1446
      %v1487 = vpop.f32.mrf.mxu0
      %v1488 = vadd.f32 %v1433, %v1487
      %1489 = vmatmul.f32.gmra.mxu0 %v1448
      %v1490 = vpop.f32.mrf.mxu0
      %v1491 = vadd.f32 %v1433, %v1490
      %1492 = vmatmul.f32.gmra.mxu0 %v1450
      %v1493 = vpop.f32.mrf.mxu0
      %v1494 = vadd.f32 %v1433, %v1493
      %1495 = vdwg.mxu0
      %v1496 = vadd.f32 %v1422, %v1473
      %v1497 = vadd.f32 %v1423, %v1476
      %v1498 = vadd.f32 %v1424, %v1479
      %v1499 = vadd.f32 %v1425, %v1482
      %v1500 = vadd.f32 %v1426, %v1485
      %v1501 = vadd.f32 %v1427, %v1488
      %v1502 = vadd.f32 %v1428, %v1491
      %v1503 = vadd.f32 %v1429, %v1494
      %v1504 = vmul.f32 %v1496, 0.5
      %v1505 = vmul.f32 %v1497, 0.5
      %v1506 = vmul.f32 %v1498, 0.5
      %v1507 = vmul.f32 %v1499, 0.5
      %v1508 = vmul.f32 %v1500, 0.5
      %v1509 = vmul.f32 %v1501, 0.5
      %v1510 = vmul.f32 %v1502, 0.5
      %v1511 = vmul.f32 %v1503, 0.5
      %v1512 = vmul.f32 %v1496, 0.70710677
      %v1513 = vmul.f32 %v1497, 0.70710677
      %v1514 = vmul.f32 %v1498, 0.70710677
      %v1515 = vmul.f32 %v1499, 0.70710677
      %v1516 = vmul.f32 %v1500, 0.70710677
      %v1517 = vmul.f32 %v1501, 0.70710677
      %v1518 = vmul.f32 %v1502, 0.70710677
      %v1519 = vmul.f32 %v1503, 0.70710677
      %v1520 = vmul.f32 %v1512, %v1512
      %v1521 = vmin.f32 16.0, %v1520
      %v1522 = vmul.f32 %v1521, 2.1237322e-06
      %v1523 = vadd.f32 %v1522, 0.00028619796
      %v1524 = vmul.f32 %v1521, %v1523
      %v1525 = vadd.f32 %v1524, 0.0036580483
      %v1526 = vmul.f32 %v1521, %v1525
      %v1527 = vadd.f32 %v1526, 0.05243302
      %v1528 = vmul.f32 %v1521, %v1527
      %v1529 = vadd.f32 %v1528, 0.18741608
      %v1530 = vmul.f32 %v1521, %v1529
      %v1531 = vadd.f32 %v1530, 1.1283791
      %v1532 = vmul.f32 %v1512, %v1531
      %v1533 = vmul.f32 %v1521, 3.8918573e-05
      %v1534 = vadd.f32 %v1533, 0.001143296
      %v1535 = vmul.f32 %v1521, %v1534
      %v1536 = vadd.f32 %v1535, 0.014752088
      %v1537 = vmul.f32 %v1521, %v1536
      %v1538 = vadd.f32 %v1537, 0.112945676
      %v1539 = vmul.f32 %v1521, %v1538
      %v1540 = vadd.f32 %v1539, 0.4994258
      %v1541 = vmul.f32 %v1521, %v1540
      %v1542 = vadd.f32 %v1541, 1.0
      %v1543 = vrcp.pop %v1542
      %v1544 = vmul.f32 %v1542, %v1543
      %v1545 = vsub.f32 1.0, %v1544
      %v1546 = vmul.f32 %v1543, %v1545
      %v1547 = vadd.f32 %v1543, %v1546
      %vm1548 = vweird.f32 %v1542
      %vm1549 = vweird.f32 %v1543
      %vm1550 = vmor %vm1548, %vm1549
      %v1551 = vsel %vm1550, %v1543, %v1547
      %v1552 = vand.u32 2147483647, %v1542
      %vm1553 = vcmp.eq.f32.partialorder %v1552, 8.507059e+37
      %v1554 = vand.u32 %v1542, 2147483648
      %v1555 = vor.u32 1.1754944e-38, %v1554
      %v1556 = vsel %vm1553, %v1555, %v1551
      %v1557 = vmul.f32 %v1532, %v1556
      %v1558 = vmin.f32 %v1557, 1.0
      %v1559 = vmax.f32 %v1558, -1.0
      %v1560 = vmul.f32 %v1513, %v1513
      %v1561 = vmin.f32 16.0, %v1560
      %v1562 = vmul.f32 %v1561, 2.1237322e-06
      %v1563 = vadd.f32 %v1562, 0.00028619796
      %v1564 = vmul.f32 %v1561, %v1563
      %v1565 = vadd.f32 %v1564, 0.0036580483
      %v1566 = vmul.f32 %v1561, %v1565
      %v1567 = vadd.f32 %v1566, 0.05243302
      %v1568 = vmul.f32 %v1561, %v1567
      %v1569 = vadd.f32 %v1568, 0.18741608
      %v1570 = vmul.f32 %v1561, %v1569
      %v1571 = vadd.f32 %v1570, 1.1283791
      %v1572 = vmul.f32 %v1513, %v1571
      %v1573 = vmul.f32 %v1561, 3.8918573e-05
      %v1574 = vadd.f32 %v1573, 0.001143296
      %v1575 = vmul.f32 %v1561, %v1574
      %v1576 = vadd.f32 %v1575, 0.014752088
      %v1577 = vmul.f32 %v1561, %v1576
      %v1578 = vadd.f32 %v1577, 0.112945676
      %v1579 = vmul.f32 %v1561, %v1578
      %v1580 = vadd.f32 %v1579, 0.4994258
      %v1581 = vmul.f32 %v1561, %v1580
      %v1582 = vadd.f32 %v1581, 1.0
      %v1583 = vrcp.pop %v1582
      %v1584 = vmul.f32 %v1582, %v1583
      %v1585 = vsub.f32 1.0, %v1584
      %v1586 = vmul.f32 %v1583, %v1585
      %v1587 = vadd.f32 %v1583, %v1586
      %vm1588 = vweird.f32 %v1582
      %vm1589 = vweird.f32 %v1583
      %vm1590 = vmor %vm1588, %vm1589
      %v1591 = vsel %vm1590, %v1583, %v1587
      %v1592 = vand.u32 2147483647, %v1582
      %vm1593 = vcmp.eq.f32.partialorder %v1592, 8.507059e+37
      %v1594 = vand.u32 %v1582, 2147483648
      %v1595 = vor.u32 1.1754944e-38, %v1594
      %v1596 = vsel %vm1593, %v1595, %v1591
      %v1597 = vmul.f32 %v1572, %v1596
      %v1598 = vmin.f32 %v1597, 1.0
      %v1599 = vmax.f32 %v1598, -1.0
      %v1600 = vmul.f32 %v1514, %v1514
      %v1601 = vmin.f32 16.0, %v1600
      %v1602 = vmul.f32 %v1601, 2.1237322e-06
      %v1603 = vadd.f32 %v1602, 0.00028619796
      %v1604 = vmul.f32 %v1601, %v1603
      %v1605 = vadd.f32 %v1604, 0.0036580483
      %v1606 = vmul.f32 %v1601, %v1605
      %v1607 = vadd.f32 %v1606, 0.05243302
      %v1608 = vmul.f32 %v1601, %v1607
      %v1609 = vadd.f32 %v1608, 0.18741608
      %v1610 = vmul.f32 %v1601, %v1609
      %v1611 = vadd.f32 %v1610, 1.1283791
      %v1612 = vmul.f32 %v1514, %v1611
      %v1613 = vmul.f32 %v1601, 3.8918573e-05
      %v1614 = vadd.f32 %v1613, 0.001143296
      %v1615 = vmul.f32 %v1601, %v1614
      %v1616 = vadd.f32 %v1615, 0.014752088
      %v1617 = vmul.f32 %v1601, %v1616
      %v1618 = vadd.f32 %v1617, 0.112945676
      %v1619 = vmul.f32 %v1601, %v1618
      %v1620 = vadd.f32 %v1619, 0.4994258
      %v1621 = vmul.f32 %v1601, %v1620
      %v1622 = vadd.f32 %v1621, 1.0
      %v1623 = vrcp.pop %v1622
      %v1624 = vmul.f32 %v1622, %v1623
      %v1625 = vsub.f32 1.0, %v1624
      %v1626 = vmul.f32 %v1623, %v1625
      %v1627 = vadd.f32 %v1623, %v1626
      %vm1628 = vweird.f32 %v1622
      %vm1629 = vweird.f32 %v1623
      %vm1630 = vmor %vm1628, %vm1629
      %v1631 = vsel %vm1630, %v1623, %v1627
      %v1632 = vand.u32 2147483647, %v1622
      %vm1633 = vcmp.eq.f32.partialorder %v1632, 8.507059e+37
      %v1634 = vand.u32 %v1622, 2147483648
      %v1635 = vor.u32 1.1754944e-38, %v1634
      %v1636 = vsel %vm1633, %v1635, %v1631
      %v1637 = vmul.f32 %v1612, %v1636
      %v1638 = vmin.f32 %v1637, 1.0
      %v1639 = vmax.f32 %v1638, -1.0
      %v1640 = vmul.f32 %v1515, %v1515
      %v1641 = vmin.f32 16.0, %v1640
      %v1642 = vmul.f32 %v1641, 2.1237322e-06
      %v1643 = vadd.f32 %v1642, 0.00028619796
      %v1644 = vmul.f32 %v1641, %v1643
      %v1645 = vadd.f32 %v1644, 0.0036580483
      %v1646 = vmul.f32 %v1641, %v1645
      %v1647 = vadd.f32 %v1646, 0.05243302
      %v1648 = vmul.f32 %v1641, %v1647
      %v1649 = vadd.f32 %v1648, 0.18741608
      %v1650 = vmul.f32 %v1641, %v1649
      %v1651 = vadd.f32 %v1650, 1.1283791
      %v1652 = vmul.f32 %v1515, %v1651
      %v1653 = vmul.f32 %v1641, 3.8918573e-05
      %v1654 = vadd.f32 %v1653, 0.001143296
      %v1655 = vmul.f32 %v1641, %v1654
      %v1656 = vadd.f32 %v1655, 0.014752088
      %v1657 = vmul.f32 %v1641, %v1656
      %v1658 = vadd.f32 %v1657, 0.112945676
      %v1659 = vmul.f32 %v1641, %v1658
      %v1660 = vadd.f32 %v1659, 0.4994258
      %v1661 = vmul.f32 %v1641, %v1660
      %v1662 = vadd.f32 %v1661, 1.0
      %v1663 = vrcp.pop %v1662
      %v1664 = vmul.f32 %v1662, %v1663
      %v1665 = vsub.f32 1.0, %v1664
      %v1666 = vmul.f32 %v1663, %v1665
      %v1667 = vadd.f32 %v1663, %v1666
      %vm1668 = vweird.f32 %v1662
      %vm1669 = vweird.f32 %v1663
      %vm1670 = vmor %vm1668, %vm1669
      %v1671 = vsel %vm1670, %v1663, %v1667
      %v1672 = vand.u32 2147483647, %v1662
      %vm1673 = vcmp.eq.f32.partialorder %v1672, 8.507059e+37
      %v1674 = vand.u32 %v1662, 2147483648
      %v1675 = vor.u32 1.1754944e-38, %v1674
      %v1676 = vsel %vm1673, %v1675, %v1671
      %v1677 = vmul.f32 %v1652, %v1676
      %v1678 = vmin.f32 %v1677, 1.0
      %v1679 = vmax.f32 %v1678, -1.0
      %v1680 = vmul.f32 %v1516, %v1516
      %v1681 = vmin.f32 16.0, %v1680
      %v1682 = vmul.f32 %v1681, 2.1237322e-06
      %v1683 = vadd.f32 %v1682, 0.00028619796
      %v1684 = vmul.f32 %v1681, %v1683
      %v1685 = vadd.f32 %v1684, 0.0036580483
      %v1686 = vmul.f32 %v1681, %v1685
      %v1687 = vadd.f32 %v1686, 0.05243302
      %v1688 = vmul.f32 %v1681, %v1687
      %v1689 = vadd.f32 %v1688, 0.18741608
      %v1690 = vmul.f32 %v1681, %v1689
      %v1691 = vadd.f32 %v1690, 1.1283791
      %v1692 = vmul.f32 %v1516, %v1691
      %v1693 = vmul.f32 %v1681, 3.8918573e-05
      %v1694 = vadd.f32 %v1693, 0.001143296
      %v1695 = vmul.f32 %v1681, %v1694
      %v1696 = vadd.f32 %v1695, 0.014752088
      %v1697 = vmul.f32 %v1681, %v1696
      %v1698 = vadd.f32 %v1697, 0.112945676
      %v1699 = vmul.f32 %v1681, %v1698
      %v1700 = vadd.f32 %v1699, 0.4994258
      %v1701 = vmul.f32 %v1681, %v1700
      %v1702 = vadd.f32 %v1701, 1.0
      %v1703 = vrcp.pop %v1702
      %v1704 = vmul.f32 %v1702, %v1703
      %v1705 = vsub.f32 1.0, %v1704
      %v1706 = vmul.f32 %v1703, %v1705
      %v1707 = vadd.f32 %v1703, %v1706
      %vm1708 = vweird.f32 %v1702
      %vm1709 = vweird.f32 %v1703
      %vm1710 = vmor %vm1708, %vm1709
      %v1711 = vsel %vm1710, %v1703, %v1707
      %v1712 = vand.u32 2147483647, %v1702
      %vm1713 = vcmp.eq.f32.partialorder %v1712, 8.507059e+37
      %v1714 = vand.u32 %v1702, 2147483648
      %v1715 = vor.u32 1.1754944e-38, %v1714
      %v1716 = vsel %vm1713, %v1715, %v1711
      %v1717 = vmul.f32 %v1692, %v1716
      %v1718 = vmin.f32 %v1717, 1.0
      %v1719 = vmax.f32 %v1718, -1.0
      %v1720 = vmul.f32 %v1517, %v1517
      %v1721 = vmin.f32 16.0, %v1720
      %v1722 = vmul.f32 %v1721, 2.1237322e-06
      %v1723 = vadd.f32 %v1722, 0.00028619796
      %v1724 = vmul.f32 %v1721, %v1723
      %v1725 = vadd.f32 %v1724, 0.0036580483
      %v1726 = vmul.f32 %v1721, %v1725
      %v1727 = vadd.f32 %v1726, 0.05243302
      %v1728 = vmul.f32 %v1721, %v1727
      %v1729 = vadd.f32 %v1728, 0.18741608
      %v1730 = vmul.f32 %v1721, %v1729
      %v1731 = vadd.f32 %v1730, 1.1283791
      %v1732 = vmul.f32 %v1517, %v1731
      %v1733 = vmul.f32 %v1721, 3.8918573e-05
      %v1734 = vadd.f32 %v1733, 0.001143296
      %v1735 = vmul.f32 %v1721, %v1734
      %v1736 = vadd.f32 %v1735, 0.014752088
      %v1737 = vmul.f32 %v1721, %v1736
      %v1738 = vadd.f32 %v1737, 0.112945676
      %v1739 = vmul.f32 %v1721, %v1738
      %v1740 = vadd.f32 %v1739, 0.4994258
      %v1741 = vmul.f32 %v1721, %v1740
      %v1742 = vadd.f32 %v1741, 1.0
      %v1743 = vrcp.pop %v1742
      %v1744 = vmul.f32 %v1742, %v1743
      %v1745 = vsub.f32 1.0, %v1744
      %v1746 = vmul.f32 %v1743, %v1745
      %v1747 = vadd.f32 %v1743, %v1746
      %vm1748 = vweird.f32 %v1742
      %vm1749 = vweird.f32 %v1743
      %vm1750 = vmor %vm1748, %vm1749
      %v1751 = vsel %vm1750, %v1743, %v1747
      %v1752 = vand.u32 2147483647, %v1742
      %vm1753 = vcmp.eq.f32.partialorder %v1752, 8.507059e+37
      %v1754 = vand.u32 %v1742, 2147483648
      %v1755 = vor.u32 1.1754944e-38, %v1754
      %v1756 = vsel %vm1753, %v1755, %v1751
      %v1757 = vmul.f32 %v1732, %v1756
      %v1758 = vmin.f32 %v1757, 1.0
      %v1759 = vmax.f32 %v1758, -1.0
      %v1760 = vmul.f32 %v1518, %v1518
      %v1761 = vmin.f32 16.0, %v1760
      %v1762 = vmul.f32 %v1761, 2.1237322e-06
      %v1763 = vadd.f32 %v1762, 0.00028619796
      %v1764 = vmul.f32 %v1761, %v1763
      %v1765 = vadd.f32 %v1764, 0.0036580483
      %v1766 = vmul.f32 %v1761, %v1765
      %v1767 = vadd.f32 %v1766, 0.05243302
      %v1768 = vmul.f32 %v1761, %v1767
      %v1769 = vadd.f32 %v1768, 0.18741608
      %v1770 = vmul.f32 %v1761, %v1769
      %v1771 = vadd.f32 %v1770, 1.1283791
      %v1772 = vmul.f32 %v1518, %v1771
      %v1773 = vmul.f32 %v1761, 3.8918573e-05
      %v1774 = vadd.f32 %v1773, 0.001143296
      %v1775 = vmul.f32 %v1761, %v1774
      %v1776 = vadd.f32 %v1775, 0.014752088
      %v1777 = vmul.f32 %v1761, %v1776
      %v1778 = vadd.f32 %v1777, 0.112945676
      %v1779 = vmul.f32 %v1761, %v1778
      %v1780 = vadd.f32 %v1779, 0.4994258
      %v1781 = vmul.f32 %v1761, %v1780
      %v1782 = vadd.f32 %v1781, 1.0
      %v1783 = vrcp.pop %v1782
      %v1784 = vmul.f32 %v1782, %v1783
      %v1785 = vsub.f32 1.0, %v1784
      %v1786 = vmul.f32 %v1783, %v1785
      %v1787 = vadd.f32 %v1783, %v1786
      %vm1788 = vweird.f32 %v1782
      %vm1789 = vweird.f32 %v1783
      %vm1790 = vmor %vm1788, %vm1789
      %v1791 = vsel %vm1790, %v1783, %v1787
      %v1792 = vand.u32 2147483647, %v1782
      %vm1793 = vcmp.eq.f32.partialorder %v1792, 8.507059e+37
      %v1794 = vand.u32 %v1782, 2147483648
      %v1795 = vor.u32 1.1754944e-38, %v1794
      %v1796 = vsel %vm1793, %v1795, %v1791
      %v1797 = vmul.f32 %v1772, %v1796
      %v1798 = vmin.f32 %v1797, 1.0
      %v1799 = vmax.f32 %v1798, -1.0
      %v1800 = vmul.f32 %v1519, %v1519
      %v1801 = vmin.f32 16.0, %v1800
      %v1802 = vmul.f32 %v1801, 2.1237322e-06
      %v1803 = vadd.f32 %v1802, 0.00028619796
      %v1804 = vmul.f32 %v1801, %v1803
      %v1805 = vadd.f32 %v1804, 0.0036580483
      %v1806 = vmul.f32 %v1801, %v1805
      %v1807 = vadd.f32 %v1806, 0.05243302
      %v1808 = vmul.f32 %v1801, %v1807
      %v1809 = vadd.f32 %v1808, 0.18741608
      %v1810 = vmul.f32 %v1801, %v1809
      %v1811 = vadd.f32 %v1810, 1.1283791
      %v1812 = vmul.f32 %v1519, %v1811
      %v1813 = vmul.f32 %v1801, 3.8918573e-05
      %v1814 = vadd.f32 %v1813, 0.001143296
      %v1815 = vmul.f32 %v1801, %v1814
      %v1816 = vadd.f32 %v1815, 0.014752088
      %v1817 = vmul.f32 %v1801, %v1816
      %v1818 = vadd.f32 %v1817, 0.112945676
      %v1819 = vmul.f32 %v1801, %v1818
      %v1820 = vadd.f32 %v1819, 0.4994258
      %v1821 = vmul.f32 %v1801, %v1820
      %v1822 = vadd.f32 %v1821, 1.0
      %v1823 = vrcp.pop %v1822
      %v1824 = vmul.f32 %v1822, %v1823
      %v1825 = vsub.f32 1.0, %v1824
      %v1826 = vmul.f32 %v1823, %v1825
      %v1827 = vadd.f32 %v1823, %v1826
      %vm1828 = vweird.f32 %v1822
      %vm1829 = vweird.f32 %v1823
      %vm1830 = vmor %vm1828, %vm1829
      %v1831 = vsel %vm1830, %v1823, %v1827
      %v1832 = vand.u32 2147483647, %v1822
      %vm1833 = vcmp.eq.f32.partialorder %v1832, 8.507059e+37
      %v1834 = vand.u32 %v1822, 2147483648
      %v1835 = vor.u32 1.1754944e-38, %v1834
      %v1836 = vsel %vm1833, %v1835, %v1831
      %v1837 = vmul.f32 %v1812, %v1836
      %v1838 = vmin.f32 %v1837, 1.0
      %v1839 = vmax.f32 %v1838, -1.0
      %v1840 = vadd.f32 %v1559, 1.0
      %v1841 = vadd.f32 %v1599, 1.0
      %v1842 = vadd.f32 %v1639, 1.0
      %v1843 = vadd.f32 %v1679, 1.0
      %v1844 = vadd.f32 %v1719, 1.0
      %v1845 = vadd.f32 %v1759, 1.0
      %v1846 = vadd.f32 %v1799, 1.0
      %v1847 = vadd.f32 %v1839, 1.0
      %v1848 = vmul.f32 %v1504, %v1840
      %v1849 = vmul.f32 %v1505, %v1841
      %v1850 = vmul.f32 %v1506, %v1842
      %v1851 = vmul.f32 %v1507, %v1843
      %v1852 = vmul.f32 %v1508, %v1844
      %v1853 = vmul.f32 %v1509, %v1845
      %v1854 = vmul.f32 %v1510, %v1846
      %v1855 = vmul.f32 %v1511, %v1847
      %1856 = vst.msk [vmem:[%s305] sm:$0xff] %vm780, %v1848
      %1857 = vst.msk [vmem:[%s305 + $0x8] sm:$0xff] %vm780, %v1849
      %1858 = vst.msk [vmem:[%s305 + $0x10] sm:$0xff] %vm780, %v1850
      %1859 = vst.msk [vmem:[%s305 + $0x18] sm:$0xff] %vm780, %v1851
      %1860 = vst.msk [vmem:[%s305 + $0x20] sm:$0xff] %vm780, %v1852
      %1861 = vst.msk [vmem:[%s305 + $0x28] sm:$0xff] %vm780, %v1853
      %1862 = vst.msk [vmem:[%s305 + $0x30] sm:$0xff] %vm780, %v1854
      %1863 = vst.msk [vmem:[%s305 + $0x38] sm:$0xff] %vm780, %v1855
      %p1864 = scmp.lt.s32.totalorder %s19, 1
      %s1865 = scalar_select %p1864, %s19, 1
      %s1866 = smul.addr %s1865, 8
      %s1867 = smul.addr %s1866, 8
      %s1868 = scalar_lea.vmem %s8, %s1867
      // Predicated region
      $region53: #{tpu_custom_call.1} parent=51 // pred_check
        %p1869 = pneg %p210
      $region54: #{tpu_custom_call.1} parent=51 // pred_check_branch
        %1871 = sbr.rel (%p1869) target = $region56
      $region55: #{tpu_custom_call.1} parent=51 // pred_region
        _
      $region56: #{tpu_custom_call.1} parent=51 // pred_fallthru
        _
    $region52: #{tpu_custom_call.1} parent=5 // pred_fallthru
      _
    %p1872 = scmp.le.s32.totalorder 2, %s14
    // Predicated region
    $region57: #{tpu_custom_call.1} parent=5 // pred_check
      %p1873 = pneg %p1872
    $region58: #{tpu_custom_call.1} parent=5 // pred_check_branch
      %1875 = sbr.rel (%p1873) target = $region60
    $region59: #{tpu_custom_call.1} parent=5 // pred_region
      %s1876 = ssub.s32 %s14, 2
      // Predicated region
      $region61: #{tpu_custom_call.1} parent=59 // pred_check
        %p1877 = pneg %p216
      $region62: #{tpu_custom_call.1} parent=59 // pred_check_branch
        %1879 = sbr.rel (%p1877) target = $region64
      $region63: #{tpu_custom_call.1} parent=59 // pred_region
        %p1880 = scmp.lt.s32.totalorder %s20, 1
        %s1881 = scalar_select %p1880, %s20, 1
        %s1882 = smul.addr %s1881, 8
        %s1883 = smul.addr %s1882, 8
        %s1884 = scalar_lea.vmem %s8, %s1883
      $region64: #{tpu_custom_call.1} parent=59 // pred_fallthru
        _
    $region60: #{tpu_custom_call.1} parent=5 // pred_fallthru
      _
  $region6: #{tpu_custom_call.1} parent=0 // loop_footer
    %s18 = sadd.s32 1, %s14
  $region7: #{tpu_custom_call.1} parent=0 // loop_footer_branch
    %13 = sbr.rel target = $region3
  $region8: #{tpu_custom_call.1} parent=0 // loop_exit
    _

</llo_original>
